<compile_context>
chip_gen: v7x
topology: tpu7x:2x2x1
jax: 0.10.0
libtpu: 0.0.40
codegen_flags: <defaults>
</compile_context>

<pallas_src>
import functools

import jax
import jax.numpy as jnp
from jax.experimental import pallas as pl
from jax.experimental.pallas import tpu as pltpu


def _encoder_kernel(
    seed_ref,                       # SMEM (1,) int32, scalar-prefetched
    x_ref,
    w1, b1, g1, bt1,
    w2, b2, g2, bt2,
    w3, b3, g3, bt3,
    w4, b4, g4, bt4,
    w5, b5, g5, bt5,
    w_head, b_head,                 # fused [w_mu || w_logvar], [b_mu || b_logvar]
    out_ref,                        # (block_b, 2*latent) fused output
    *, eps, p,
):
    x = x_ref[...].astype(jnp.float32)

    # L2-normalize rows; tiny clamp guards all-zero / padded rows.
    norm = jnp.sqrt(jnp.sum(x * x, axis=-1, keepdims=True))
    x = x / jnp.maximum(norm, 1e-12)

    # Dropout (F.dropout, training=True semantics). `p` is static; the seed is
    # a runtime scalar offset by the grid step for independent per-tile masks.
    if p > 0.0:
        pltpu.prng_seed(seed_ref[0] + pl.program_id(0))
        bits = pltpu.bitcast(pltpu.prng_random_bits(x.shape), jnp.uint32)
        bits31 = pltpu.bitcast(bits & jnp.uint32(0x7FFFFFFF), jnp.int32)
        thresh = jnp.int32(int(p * (1 << 31)))          # static threshold
        keep = bits31 >= thresh                         # P(keep) = 1 - p
        x = jnp.where(keep, x * (1.0 / (1.0 - p)), 0.0)

    def linear(h, w_r, b_r):
        return jnp.dot(h, w_r[...], preferred_element_type=jnp.float32) + b_r[...]

    def swish(h):
        return h * jax.nn.sigmoid(h)

    def layernorm(h, g_r, bt_r):
        mean = jnp.mean(h, axis=-1, keepdims=True)
        var = jnp.mean((h - mean) ** 2, axis=-1, keepdims=True)
        return (h - mean) * jax.lax.rsqrt(var + eps) * g_r[...] + bt_r[...]

    # Residual chain with a running accumulator (no re-summing).
    h1 = layernorm(swish(linear(x, w1, b1)), g1, bt1)
    s = h1
    h2 = layernorm(swish(linear(h1, w2, b2) + s), g2, bt2)
    s = s + h2
    h3 = layernorm(swish(linear(h2, w3, b3) + s), g3, bt3)
    s = s + h3
    h4 = layernorm(swish(linear(h3, w4, b4) + s), g4, bt4)
    s = s + h4
    h5 = layernorm(swish(linear(h4, w5, b5) + s), g5, bt5)

    # Fused mu||logvar head: one matmul, one (lane-denser) store.
    out_ref[...] = linear(h5, w_head, b_head).astype(out_ref.dtype)


def init_encoder_params(key, input_dim, hidden_dim, latent_dim):
    """Deterministic synthetic parameters (shapes match the nn.Module)."""
    keys = jax.random.split(key, 14)
    params = {}

    def lin(kw, kb, d_in, d_out):
        w = 0.05 * jax.random.normal(kw, (d_in, d_out), jnp.float32)
        b = 0.01 * jax.random.normal(kb, (1, d_out), jnp.float32)
        return w, b

    params["w1"], params["b1"] = lin(keys[0], keys[1], input_dim, hidden_dim)
    params["w2"], params["b2"] = lin(keys[2], keys[3], hidden_dim, hidden_dim)
    params["w3"], params["b3"] = lin(keys[4], keys[5], hidden_dim, hidden_dim)
    params["w4"], params["b4"] = lin(keys[6], keys[7], hidden_dim, hidden_dim)
    params["w5"], params["b5"] = lin(keys[8], keys[9], hidden_dim, hidden_dim)
    params["w_mu"], params["b_mu"] = lin(keys[10], keys[11], hidden_dim, latent_dim)
    params["w_lv"], params["b_lv"] = lin(keys[12], keys[13], hidden_dim, latent_dim)
    for i in range(1, 6):
        params[f"g{i}"] = jnp.ones((1, hidden_dim), jnp.float32)
        params[f"bt{i}"] = jnp.zeros((1, hidden_dim), jnp.float32)
    return params


_PARAM_ORDER = (
    "w1", "b1", "g1", "bt1",
    "w2", "b2", "g2", "bt2",
    "w3", "b3", "g3", "bt3",
    "w4", "b4", "g4", "bt4",
    "w5", "b5", "g5", "bt5",
)


def _round_up(a, m):
    return (a + m - 1) // m * m


def encoder_forward(x, params, dropout_rate=0.0, eps=0.1, seed=0, block_b=256):
    B, input_dim = x.shape
    latent_dim = params["w_mu"].shape[1]

    # Batch tiling: big row tiles (weights are tiny and stay resident); pad B
    # up to a multiple of the tile so the (8, 128) block rule is satisfied.
    block_b = min(block_b, _round_up(B, 8))
    B_pad = _round_up(B, block_b)
    if B_pad != B:
        x = jnp.pad(x, ((0, B_pad - B), (0, 0)))

    # Fuse mu / logvar heads into one (hidden, 2*latent) weight + bias.
    w_head = jnp.concatenate([params["w_mu"], params["w_lv"]], axis=1)
    b_head = jnp.concatenate([params["b_mu"], params["b_lv"]], axis=1)

    operands = [x] + [params[k] for k in _PARAM_ORDER] + [w_head, b_head]
    seed_arr = jnp.asarray([seed], jnp.int32)

    def const_spec(a):
        nd = a.ndim
        # Constant index_map keeps parameters resident across grid steps.
        return pl.BlockSpec(a.shape, lambda i, s, _nd=nd: (0,) * _nd)

    in_specs = [pl.BlockSpec((block_b, input_dim), lambda i, s: (i, 0))]
    in_specs += [const_spec(a) for a in operands[1:]]

    kernel = functools.partial(
        _encoder_kernel, eps=float(eps), p=float(dropout_rate)
    )

    out = pl.pallas_call(
        kernel,
        out_shape=jax.ShapeDtypeStruct((B_pad, 2 * latent_dim), jnp.float32),
        grid_spec=pltpu.PrefetchScalarGridSpec(
            num_scalar_prefetch=1,
            grid=(B_pad // block_b,),
            in_specs=in_specs,
            out_specs=pl.BlockSpec(
                (block_b, 2 * latent_dim), lambda i, s: (i, 0)
            ),
        ),
        compiler_params=pltpu.CompilerParams(
            dimension_semantics=("parallel",)
        ),
    )(seed_arr, *operands)

    mu = out[:B, :latent_dim]
    logvar = out[:B, latent_dim:]
    return mu, logvar


def encoder_forward_ref(x, params, eps=0.1):
    """Pure-JAX reference (dropout_rate = 0)."""
    x = x / jnp.sqrt(jnp.sum(x * x, axis=-1, keepdims=True))

    def lin(h, w, b):
        return h @ w + b

    def swish(h):
        return h * jax.nn.sigmoid(h)

    def ln(h, g, b):
        m = jnp.mean(h, -1, keepdims=True)
        v = jnp.mean((h - m) ** 2, -1, keepdims=True)
        return (h - m) / jnp.sqrt(v + eps) * g + b

    p = params
    h1 = ln(swish(lin(x, p["w1"], p["b1"])), p["g1"], p["bt1"])
    h2 = ln(swish(lin(h1, p["w2"], p["b2"]) + h1), p["g2"], p["bt2"])
    h3 = ln(swish(lin(h2, p["w3"], p["b3"]) + h1 + h2), p["g3"], p["bt3"])
    h4 = ln(swish(lin(h3, p["w4"], p["b4"]) + h1 + h2 + h3), p["g4"], p["bt4"])
    h5 = ln(swish(lin(h4, p["w5"], p["b5"]) + h1 + h2 + h3 + h4), p["g5"], p["bt5"])
    return lin(h5, p["w_mu"], p["b_mu"]), lin(h5, p["w_lv"], p["b_lv"])


if __name__ == "__main__":
    B, INPUT_DIM, HIDDEN_DIM, LATENT_DIM = 8, 64, 32, 16

    key = jax.random.PRNGKey(0)
    kx, kp = jax.random.split(key)
    # strictly positive input (RecVAE inputs are implicit-feedback counts),
    # avoids a zero row norm so the kernel and the no-eps reference agree.
    x = jax.random.uniform(kx, (B, INPUT_DIM), jnp.float32, minval=0.1, maxval=1.0)
    params = init_encoder_params(kp, INPUT_DIM, HIDDEN_DIM, LATENT_DIM)

    mu, logvar = encoder_forward(x, params, dropout_rate=0.0, seed=0)
    jax.block_until_ready((mu, logvar))

    mu_ref, logvar_ref = encoder_forward_ref(x, params)
    assert jnp.allclose(mu, mu_ref, atol=1e-5, rtol=1e-5)
    assert jnp.allclose(logvar, logvar_ref, atol=1e-5, rtol=1e-5)

    print("KERNEL_OK")
</pallas_src>

<mosaic_0001>
module attributes {stable_mosaic.version = 11 : i64} {
  func.func @_encoder_kernel(%arg0: i32, %arg1: memref<1xi32, #tpu.memory_space<smem>>, %arg2: memref<8x64xf32, #tpu.memory_space<vmem>>, %arg3: memref<64x32xf32, #tpu.memory_space<vmem>>, %arg4: memref<1x32xf32, #tpu.memory_space<vmem>>, %arg5: memref<1x32xf32, #tpu.memory_space<vmem>>, %arg6: memref<1x32xf32, #tpu.memory_space<vmem>>, %arg7: memref<32x32xf32, #tpu.memory_space<vmem>>, %arg8: memref<1x32xf32, #tpu.memory_space<vmem>>, %arg9: memref<1x32xf32, #tpu.memory_space<vmem>>, %arg10: memref<1x32xf32, #tpu.memory_space<vmem>>, %arg11: memref<32x32xf32, #tpu.memory_space<vmem>>, %arg12: memref<1x32xf32, #tpu.memory_space<vmem>>, %arg13: memref<1x32xf32, #tpu.memory_space<vmem>>, %arg14: memref<1x32xf32, #tpu.memory_space<vmem>>, %arg15: memref<32x32xf32, #tpu.memory_space<vmem>>, %arg16: memref<1x32xf32, #tpu.memory_space<vmem>>, %arg17: memref<1x32xf32, #tpu.memory_space<vmem>>, %arg18: memref<1x32xf32, #tpu.memory_space<vmem>>, %arg19: memref<32x32xf32, #tpu.memory_space<vmem>>, %arg20: memref<1x32xf32, #tpu.memory_space<vmem>>, %arg21: memref<1x32xf32, #tpu.memory_space<vmem>>, %arg22: memref<1x32xf32, #tpu.memory_space<vmem>>, %arg23: memref<32x32xf32, #tpu.memory_space<vmem>>, %arg24: memref<1x32xf32, #tpu.memory_space<vmem>>, %arg25: memref<8x32xf32, #tpu.memory_space<vmem>>) attributes {dimension_semantics = [#tpu.dimension_semantics<parallel>], iteration_bounds = array<i64: 1>, scalar_prefetch = 1 : i64, scratch_operands = 0 : i64, tpu.core_type = #tpu.core_type<tc>, window_params = [{transform_indices = @transform_0, window_bounds = array<i64: 8, 64>}, {pipeline_mode = #tpu.pipeline_mode<synchronous>, transform_indices = @transform_1, window_bounds = array<i64: 64, 32>}, {pipeline_mode = #tpu.pipeline_mode<synchronous>, transform_indices = @transform_2, window_bounds = array<i64: 1, 32>}, {pipeline_mode = #tpu.pipeline_mode<synchronous>, transform_indices = @transform_3, window_bounds = array<i64: 1, 32>}, {pipeline_mode = #tpu.pipeline_mode<synchronous>, transform_indices = @transform_4, window_bounds = array<i64: 1, 32>}, {pipeline_mode = #tpu.pipeline_mode<synchronous>, transform_indices = @transform_5, window_bounds = array<i64: 32, 32>}, {pipeline_mode = #tpu.pipeline_mode<synchronous>, transform_indices = @transform_6, window_bounds = array<i64: 1, 32>}, {pipeline_mode = #tpu.pipeline_mode<synchronous>, transform_indices = @transform_7, window_bounds = array<i64: 1, 32>}, {pipeline_mode = #tpu.pipeline_mode<synchronous>, transform_indices = @transform_8, window_bounds = array<i64: 1, 32>}, {pipeline_mode = #tpu.pipeline_mode<synchronous>, transform_indices = @transform_9, window_bounds = array<i64: 32, 32>}, {pipeline_mode = #tpu.pipeline_mode<synchronous>, transform_indices = @transform_10, window_bounds = array<i64: 1, 32>}, {pipeline_mode = #tpu.pipeline_mode<synchronous>, transform_indices = @transform_11, window_bounds = array<i64: 1, 32>}, {pipeline_mode = #tpu.pipeline_mode<synchronous>, transform_indices = @transform_12, window_bounds = array<i64: 1, 32>}, {pipeline_mode = #tpu.pipeline_mode<synchronous>, transform_indices = @transform_13, window_bounds = array<i64: 32, 32>}, {pipeline_mode = #tpu.pipeline_mode<synchronous>, transform_indices = @transform_14, window_bounds = array<i64: 1, 32>}, {pipeline_mode = #tpu.pipeline_mode<synchronous>, transform_indices = @transform_15, window_bounds = array<i64: 1, 32>}, {pipeline_mode = #tpu.pipeline_mode<synchronous>, transform_indices = @transform_16, window_bounds = array<i64: 1, 32>}, {pipeline_mode = #tpu.pipeline_mode<synchronous>, transform_indices = @transform_17, window_bounds = array<i64: 32, 32>}, {pipeline_mode = #tpu.pipeline_mode<synchronous>, transform_indices = @transform_18, window_bounds = array<i64: 1, 32>}, {pipeline_mode = #tpu.pipeline_mode<synchronous>, transform_indices = @transform_19, window_bounds = array<i64: 1, 32>}, {pipeline_mode = #tpu.pipeline_mode<synchronous>, transform_indices = @transform_20, window_bounds = array<i64: 1, 32>}, {pipeline_mode = #tpu.pipeline_mode<synchronous>, transform_indices = @transform_21, window_bounds = array<i64: 32, 32>}, {pipeline_mode = #tpu.pipeline_mode<synchronous>, transform_indices = @transform_22, window_bounds = array<i64: 1, 32>}, {transform_indices = @transform_23, window_bounds = array<i64: 8, 32>}]} {
    %c0 = arith.constant 0 : index
    %c0_0 = arith.constant 0 : index
    %0 = vector.load %arg2[%c0, %c0_0] : memref<8x64xf32, #tpu.memory_space<vmem>>, vector<8x64xf32>
    %1 = arith.mulf %0, %0 : vector<8x64xf32>
    %cst = arith.constant dense<0.000000e+00> : vector<8xf32>
    %2 = vector.multi_reduction <add>, %1, %cst [1] : vector<8x64xf32> to vector<8xf32>
    %3 = vector.shape_cast %2 : vector<8xf32> to vector<8x1xf32>
    %4 = math.sqrt %3 : vector<8x1xf32>
    %cst_1 = arith.constant 9.99999996E-13 : f32
    %5 = vector.broadcast %cst_1 : f32 to vector<8x1xf32>
    %6 = arith.maximumf %4, %5 : vector<8x1xf32>
    %7 = vector.broadcast %6 : vector<8x1xf32> to vector<8x64xf32>
    %8 = arith.divf %0, %7 : vector<8x64xf32>
    %c0_2 = arith.constant 0 : index
    %c0_3 = arith.constant 0 : index
    %9 = vector.load %arg3[%c0_2, %c0_3] : memref<64x32xf32, #tpu.memory_space<vmem>>, vector<64x32xf32>
    %cst_4 = arith.constant dense<0.000000e+00> : vector<8x32xf32>
    %10 = tpu.matmul %8, %9, %cst_4 {dimension_numbers = #tpu.dot_dimension_numbers<[1], [0], [0], [1], [0, 0, 1, 1], [], []>} : vector<8x64xf32>, vector<64x32xf32>, vector<8x32xf32> -> vector<8x32xf32>
    %c0_5 = arith.constant 0 : index
    %c0_6 = arith.constant 0 : index
    %11 = vector.load %arg4[%c0_5, %c0_6] : memref<1x32xf32, #tpu.memory_space<vmem>>, vector<1x32xf32>
    %12 = vector.broadcast %11 : vector<1x32xf32> to vector<8x32xf32>
    %13 = arith.addf %10, %12 : vector<8x32xf32>
    %14 = arith.negf %13 : vector<8x32xf32>
    %15 = math.exp %14 : vector<8x32xf32>
    %cst_7 = arith.constant 1.000000e+00 : f32
    %16 = vector.broadcast %cst_7 : f32 to vector<8x32xf32>
    %17 = arith.addf %16, %15 : vector<8x32xf32>
    %18 = arith.divf %16, %17 : vector<8x32xf32>
    %19 = arith.mulf %13, %18 : vector<8x32xf32>
    %cst_8 = arith.constant dense<0.000000e+00> : vector<8xf32>
    %20 = vector.multi_reduction <add>, %19, %cst_8 [1] : vector<8x32xf32> to vector<8xf32>
    %21 = vector.shape_cast %20 : vector<8xf32> to vector<8x1xf32>
    %cst_9 = arith.constant 3.200000e+01 : f32
    %22 = vector.broadcast %cst_9 : f32 to vector<8x1xf32>
    %23 = arith.divf %21, %22 : vector<8x1xf32>
    %24 = vector.broadcast %23 : vector<8x1xf32> to vector<8x32xf32>
    %25 = arith.subf %19, %24 : vector<8x32xf32>
    %26 = arith.mulf %25, %25 : vector<8x32xf32>
    %cst_10 = arith.constant dense<0.000000e+00> : vector<8xf32>
    %27 = vector.multi_reduction <add>, %26, %cst_10 [1] : vector<8x32xf32> to vector<8xf32>
    %28 = vector.shape_cast %27 : vector<8xf32> to vector<8x1xf32>
    %cst_11 = arith.constant 3.200000e+01 : f32
    %29 = vector.broadcast %cst_11 : f32 to vector<8x1xf32>
    %30 = arith.divf %28, %29 : vector<8x1xf32>
    %31 = vector.broadcast %23 : vector<8x1xf32> to vector<8x32xf32>
    %32 = arith.subf %19, %31 : vector<8x32xf32>
    %cst_12 = arith.constant 1.000000e-01 : f32
    %33 = vector.broadcast %cst_12 : f32 to vector<8x1xf32>
    %34 = arith.addf %30, %33 : vector<8x1xf32>
    %35 = math.rsqrt %34 : vector<8x1xf32>
    %36 = vector.broadcast %35 : vector<8x1xf32> to vector<8x32xf32>
    %37 = arith.mulf %32, %36 : vector<8x32xf32>
    %c0_13 = arith.constant 0 : index
    %c0_14 = arith.constant 0 : index
    %38 = vector.load %arg5[%c0_13, %c0_14] : memref<1x32xf32, #tpu.memory_space<vmem>>, vector<1x32xf32>
    %39 = vector.broadcast %38 : vector<1x32xf32> to vector<8x32xf32>
    %40 = arith.mulf %37, %39 : vector<8x32xf32>
    %c0_15 = arith.constant 0 : index
    %c0_16 = arith.constant 0 : index
    %41 = vector.load %arg6[%c0_15, %c0_16] : memref<1x32xf32, #tpu.memory_space<vmem>>, vector<1x32xf32>
    %42 = vector.broadcast %41 : vector<1x32xf32> to vector<8x32xf32>
    %43 = arith.addf %40, %42 : vector<8x32xf32>
    %c0_17 = arith.constant 0 : index
    %c0_18 = arith.constant 0 : index
    %44 = vector.load %arg7[%c0_17, %c0_18] : memref<32x32xf32, #tpu.memory_space<vmem>>, vector<32x32xf32>
    %cst_19 = arith.constant dense<0.000000e+00> : vector<8x32xf32>
    %45 = tpu.matmul %43, %44, %cst_19 {dimension_numbers = #tpu.dot_dimension_numbers<[1], [0], [0], [1], [0, 0, 1, 1], [], []>} : vector<8x32xf32>, vector<32x32xf32>, vector<8x32xf32> -> vector<8x32xf32>
    %c0_20 = arith.constant 0 : index
    %c0_21 = arith.constant 0 : index
    %46 = vector.load %arg8[%c0_20, %c0_21] : memref<1x32xf32, #tpu.memory_space<vmem>>, vector<1x32xf32>
    %47 = vector.broadcast %46 : vector<1x32xf32> to vector<8x32xf32>
    %48 = arith.addf %45, %47 : vector<8x32xf32>
    %49 = arith.addf %48, %43 : vector<8x32xf32>
    %50 = arith.negf %49 : vector<8x32xf32>
    %51 = math.exp %50 : vector<8x32xf32>
    %cst_22 = arith.constant 1.000000e+00 : f32
    %52 = vector.broadcast %cst_22 : f32 to vector<8x32xf32>
    %53 = arith.addf %52, %51 : vector<8x32xf32>
    %54 = arith.divf %52, %53 : vector<8x32xf32>
    %55 = arith.mulf %49, %54 : vector<8x32xf32>
    %cst_23 = arith.constant dense<0.000000e+00> : vector<8xf32>
    %56 = vector.multi_reduction <add>, %55, %cst_23 [1] : vector<8x32xf32> to vector<8xf32>
    %57 = vector.shape_cast %56 : vector<8xf32> to vector<8x1xf32>
    %cst_24 = arith.constant 3.200000e+01 : f32
    %58 = vector.broadcast %cst_24 : f32 to vector<8x1xf32>
    %59 = arith.divf %57, %58 : vector<8x1xf32>
    %60 = vector.broadcast %59 : vector<8x1xf32> to vector<8x32xf32>
    %61 = arith.subf %55, %60 : vector<8x32xf32>
    %62 = arith.mulf %61, %61 : vector<8x32xf32>
    %cst_25 = arith.constant dense<0.000000e+00> : vector<8xf32>
    %63 = vector.multi_reduction <add>, %62, %cst_25 [1] : vector<8x32xf32> to vector<8xf32>
    %64 = vector.shape_cast %63 : vector<8xf32> to vector<8x1xf32>
    %cst_26 = arith.constant 3.200000e+01 : f32
    %65 = vector.broadcast %cst_26 : f32 to vector<8x1xf32>
    %66 = arith.divf %64, %65 : vector<8x1xf32>
    %67 = vector.broadcast %59 : vector<8x1xf32> to vector<8x32xf32>
    %68 = arith.subf %55, %67 : vector<8x32xf32>
    %cst_27 = arith.constant 1.000000e-01 : f32
    %69 = vector.broadcast %cst_27 : f32 to vector<8x1xf32>
    %70 = arith.addf %66, %69 : vector<8x1xf32>
    %71 = math.rsqrt %70 : vector<8x1xf32>
    %72 = vector.broadcast %71 : vector<8x1xf32> to vector<8x32xf32>
    %73 = arith.mulf %68, %72 : vector<8x32xf32>
    %c0_28 = arith.constant 0 : index
    %c0_29 = arith.constant 0 : index
    %74 = vector.load %arg9[%c0_28, %c0_29] : memref<1x32xf32, #tpu.memory_space<vmem>>, vector<1x32xf32>
    %75 = vector.broadcast %74 : vector<1x32xf32> to vector<8x32xf32>
    %76 = arith.mulf %73, %75 : vector<8x32xf32>
    %c0_30 = arith.constant 0 : index
    %c0_31 = arith.constant 0 : index
    %77 = vector.load %arg10[%c0_30, %c0_31] : memref<1x32xf32, #tpu.memory_space<vmem>>, vector<1x32xf32>
    %78 = vector.broadcast %77 : vector<1x32xf32> to vector<8x32xf32>
    %79 = arith.addf %76, %78 : vector<8x32xf32>
    %80 = arith.addf %43, %79 : vector<8x32xf32>
    %c0_32 = arith.constant 0 : index
    %c0_33 = arith.constant 0 : index
    %81 = vector.load %arg11[%c0_32, %c0_33] : memref<32x32xf32, #tpu.memory_space<vmem>>, vector<32x32xf32>
    %cst_34 = arith.constant dense<0.000000e+00> : vector<8x32xf32>
    %82 = tpu.matmul %79, %81, %cst_34 {dimension_numbers = #tpu.dot_dimension_numbers<[1], [0], [0], [1], [0, 0, 1, 1], [], []>} : vector<8x32xf32>, vector<32x32xf32>, vector<8x32xf32> -> vector<8x32xf32>
    %c0_35 = arith.constant 0 : index
    %c0_36 = arith.constant 0 : index
    %83 = vector.load %arg12[%c0_35, %c0_36] : memref<1x32xf32, #tpu.memory_space<vmem>>, vector<1x32xf32>
    %84 = vector.broadcast %83 : vector<1x32xf32> to vector<8x32xf32>
    %85 = arith.addf %82, %84 : vector<8x32xf32>
    %86 = arith.addf %85, %80 : vector<8x32xf32>
    %87 = arith.negf %86 : vector<8x32xf32>
    %88 = math.exp %87 : vector<8x32xf32>
    %cst_37 = arith.constant 1.000000e+00 : f32
    %89 = vector.broadcast %cst_37 : f32 to vector<8x32xf32>
    %90 = arith.addf %89, %88 : vector<8x32xf32>
    %91 = arith.divf %89, %90 : vector<8x32xf32>
    %92 = arith.mulf %86, %91 : vector<8x32xf32>
    %cst_38 = arith.constant dense<0.000000e+00> : vector<8xf32>
    %93 = vector.multi_reduction <add>, %92, %cst_38 [1] : vector<8x32xf32> to vector<8xf32>
    %94 = vector.shape_cast %93 : vector<8xf32> to vector<8x1xf32>
    %cst_39 = arith.constant 3.200000e+01 : f32
    %95 = vector.broadcast %cst_39 : f32 to vector<8x1xf32>
    %96 = arith.divf %94, %95 : vector<8x1xf32>
    %97 = vector.broadcast %96 : vector<8x1xf32> to vector<8x32xf32>
    %98 = arith.subf %92, %97 : vector<8x32xf32>
    %99 = arith.mulf %98, %98 : vector<8x32xf32>
    %cst_40 = arith.constant dense<0.000000e+00> : vector<8xf32>
    %100 = vector.multi_reduction <add>, %99, %cst_40 [1] : vector<8x32xf32> to vector<8xf32>
    %101 = vector.shape_cast %100 : vector<8xf32> to vector<8x1xf32>
    %cst_41 = arith.constant 3.200000e+01 : f32
    %102 = vector.broadcast %cst_41 : f32 to vector<8x1xf32>
    %103 = arith.divf %101, %102 : vector<8x1xf32>
    %104 = vector.broadcast %96 : vector<8x1xf32> to vector<8x32xf32>
    %105 = arith.subf %92, %104 : vector<8x32xf32>
    %cst_42 = arith.constant 1.000000e-01 : f32
    %106 = vector.broadcast %cst_42 : f32 to vector<8x1xf32>
    %107 = arith.addf %103, %106 : vector<8x1xf32>
    %108 = math.rsqrt %107 : vector<8x1xf32>
    %109 = vector.broadcast %108 : vector<8x1xf32> to vector<8x32xf32>
    %110 = arith.mulf %105, %109 : vector<8x32xf32>
    %c0_43 = arith.constant 0 : index
    %c0_44 = arith.constant 0 : index
    %111 = vector.load %arg13[%c0_43, %c0_44] : memref<1x32xf32, #tpu.memory_space<vmem>>, vector<1x32xf32>
    %112 = vector.broadcast %111 : vector<1x32xf32> to vector<8x32xf32>
    %113 = arith.mulf %110, %112 : vector<8x32xf32>
    %c0_45 = arith.constant 0 : index
    %c0_46 = arith.constant 0 : index
    %114 = vector.load %arg14[%c0_45, %c0_46] : memref<1x32xf32, #tpu.memory_space<vmem>>, vector<1x32xf32>
    %115 = vector.broadcast %114 : vector<1x32xf32> to vector<8x32xf32>
    %116 = arith.addf %113, %115 : vector<8x32xf32>
    %117 = arith.addf %80, %116 : vector<8x32xf32>
    %c0_47 = arith.constant 0 : index
    %c0_48 = arith.constant 0 : index
    %118 = vector.load %arg15[%c0_47, %c0_48] : memref<32x32xf32, #tpu.memory_space<vmem>>, vector<32x32xf32>
    %cst_49 = arith.constant dense<0.000000e+00> : vector<8x32xf32>
    %119 = tpu.matmul %116, %118, %cst_49 {dimension_numbers = #tpu.dot_dimension_numbers<[1], [0], [0], [1], [0, 0, 1, 1], [], []>} : vector<8x32xf32>, vector<32x32xf32>, vector<8x32xf32> -> vector<8x32xf32>
    %c0_50 = arith.constant 0 : index
    %c0_51 = arith.constant 0 : index
    %120 = vector.load %arg16[%c0_50, %c0_51] : memref<1x32xf32, #tpu.memory_space<vmem>>, vector<1x32xf32>
    %121 = vector.broadcast %120 : vector<1x32xf32> to vector<8x32xf32>
    %122 = arith.addf %119, %121 : vector<8x32xf32>
    %123 = arith.addf %122, %117 : vector<8x32xf32>
    %124 = arith.negf %123 : vector<8x32xf32>
    %125 = math.exp %124 : vector<8x32xf32>
    %cst_52 = arith.constant 1.000000e+00 : f32
    %126 = vector.broadcast %cst_52 : f32 to vector<8x32xf32>
    %127 = arith.addf %126, %125 : vector<8x32xf32>
    %128 = arith.divf %126, %127 : vector<8x32xf32>
    %129 = arith.mulf %123, %128 : vector<8x32xf32>
    %cst_53 = arith.constant dense<0.000000e+00> : vector<8xf32>
    %130 = vector.multi_reduction <add>, %129, %cst_53 [1] : vector<8x32xf32> to vector<8xf32>
    %131 = vector.shape_cast %130 : vector<8xf32> to vector<8x1xf32>
    %cst_54 = arith.constant 3.200000e+01 : f32
    %132 = vector.broadcast %cst_54 : f32 to vector<8x1xf32>
    %133 = arith.divf %131, %132 : vector<8x1xf32>
    %134 = vector.broadcast %133 : vector<8x1xf32> to vector<8x32xf32>
    %135 = arith.subf %129, %134 : vector<8x32xf32>
    %136 = arith.mulf %135, %135 : vector<8x32xf32>
    %cst_55 = arith.constant dense<0.000000e+00> : vector<8xf32>
    %137 = vector.multi_reduction <add>, %136, %cst_55 [1] : vector<8x32xf32> to vector<8xf32>
    %138 = vector.shape_cast %137 : vector<8xf32> to vector<8x1xf32>
    %cst_56 = arith.constant 3.200000e+01 : f32
    %139 = vector.broadcast %cst_56 : f32 to vector<8x1xf32>
    %140 = arith.divf %138, %139 : vector<8x1xf32>
    %141 = vector.broadcast %133 : vector<8x1xf32> to vector<8x32xf32>
    %142 = arith.subf %129, %141 : vector<8x32xf32>
    %cst_57 = arith.constant 1.000000e-01 : f32
    %143 = vector.broadcast %cst_57 : f32 to vector<8x1xf32>
    %144 = arith.addf %140, %143 : vector<8x1xf32>
    %145 = math.rsqrt %144 : vector<8x1xf32>
    %146 = vector.broadcast %145 : vector<8x1xf32> to vector<8x32xf32>
    %147 = arith.mulf %142, %146 : vector<8x32xf32>
    %c0_58 = arith.constant 0 : index
    %c0_59 = arith.constant 0 : index
    %148 = vector.load %arg17[%c0_58, %c0_59] : memref<1x32xf32, #tpu.memory_space<vmem>>, vector<1x32xf32>
    %149 = vector.broadcast %148 : vector<1x32xf32> to vector<8x32xf32>
    %150 = arith.mulf %147, %149 : vector<8x32xf32>
    %c0_60 = arith.constant 0 : index
    %c0_61 = arith.constant 0 : index
    %151 = vector.load %arg18[%c0_60, %c0_61] : memref<1x32xf32, #tpu.memory_space<vmem>>, vector<1x32xf32>
    %152 = vector.broadcast %151 : vector<1x32xf32> to vector<8x32xf32>
    %153 = arith.addf %150, %152 : vector<8x32xf32>
    %154 = arith.addf %117, %153 : vector<8x32xf32>
    %c0_62 = arith.constant 0 : index
    %c0_63 = arith.constant 0 : index
    %155 = vector.load %arg19[%c0_62, %c0_63] : memref<32x32xf32, #tpu.memory_space<vmem>>, vector<32x32xf32>
    %cst_64 = arith.constant dense<0.000000e+00> : vector<8x32xf32>
    %156 = tpu.matmul %153, %155, %cst_64 {dimension_numbers = #tpu.dot_dimension_numbers<[1], [0], [0], [1], [0, 0, 1, 1], [], []>} : vector<8x32xf32>, vector<32x32xf32>, vector<8x32xf32> -> vector<8x32xf32>
    %c0_65 = arith.constant 0 : index
    %c0_66 = arith.constant 0 : index
    %157 = vector.load %arg20[%c0_65, %c0_66] : memref<1x32xf32, #tpu.memory_space<vmem>>, vector<1x32xf32>
    %158 = vector.broadcast %157 : vector<1x32xf32> to vector<8x32xf32>
    %159 = arith.addf %156, %158 : vector<8x32xf32>
    %160 = arith.addf %159, %154 : vector<8x32xf32>
    %161 = arith.negf %160 : vector<8x32xf32>
    %162 = math.exp %161 : vector<8x32xf32>
    %cst_67 = arith.constant 1.000000e+00 : f32
    %163 = vector.broadcast %cst_67 : f32 to vector<8x32xf32>
    %164 = arith.addf %163, %162 : vector<8x32xf32>
    %165 = arith.divf %163, %164 : vector<8x32xf32>
    %166 = arith.mulf %160, %165 : vector<8x32xf32>
    %cst_68 = arith.constant dense<0.000000e+00> : vector<8xf32>
    %167 = vector.multi_reduction <add>, %166, %cst_68 [1] : vector<8x32xf32> to vector<8xf32>
    %168 = vector.shape_cast %167 : vector<8xf32> to vector<8x1xf32>
    %cst_69 = arith.constant 3.200000e+01 : f32
    %169 = vector.broadcast %cst_69 : f32 to vector<8x1xf32>
    %170 = arith.divf %168, %169 : vector<8x1xf32>
    %171 = vector.broadcast %170 : vector<8x1xf32> to vector<8x32xf32>
    %172 = arith.subf %166, %171 : vector<8x32xf32>
    %173 = arith.mulf %172, %172 : vector<8x32xf32>
    %cst_70 = arith.constant dense<0.000000e+00> : vector<8xf32>
    %174 = vector.multi_reduction <add>, %173, %cst_70 [1] : vector<8x32xf32> to vector<8xf32>
    %175 = vector.shape_cast %174 : vector<8xf32> to vector<8x1xf32>
    %cst_71 = arith.constant 3.200000e+01 : f32
    %176 = vector.broadcast %cst_71 : f32 to vector<8x1xf32>
    %177 = arith.divf %175, %176 : vector<8x1xf32>
    %178 = vector.broadcast %170 : vector<8x1xf32> to vector<8x32xf32>
    %179 = arith.subf %166, %178 : vector<8x32xf32>
    %cst_72 = arith.constant 1.000000e-01 : f32
    %180 = vector.broadcast %cst_72 : f32 to vector<8x1xf32>
    %181 = arith.addf %177, %180 : vector<8x1xf32>
    %182 = math.rsqrt %181 : vector<8x1xf32>
    %183 = vector.broadcast %182 : vector<8x1xf32> to vector<8x32xf32>
    %184 = arith.mulf %179, %183 : vector<8x32xf32>
    %c0_73 = arith.constant 0 : index
    %c0_74 = arith.constant 0 : index
    %185 = vector.load %arg21[%c0_73, %c0_74] : memref<1x32xf32, #tpu.memory_space<vmem>>, vector<1x32xf32>
    %186 = vector.broadcast %185 : vector<1x32xf32> to vector<8x32xf32>
    %187 = arith.mulf %184, %186 : vector<8x32xf32>
    %c0_75 = arith.constant 0 : index
    %c0_76 = arith.constant 0 : index
    %188 = vector.load %arg22[%c0_75, %c0_76] : memref<1x32xf32, #tpu.memory_space<vmem>>, vector<1x32xf32>
    %189 = vector.broadcast %188 : vector<1x32xf32> to vector<8x32xf32>
    %190 = arith.addf %187, %189 : vector<8x32xf32>
    %c0_77 = arith.constant 0 : index
    %c0_78 = arith.constant 0 : index
    %191 = vector.load %arg23[%c0_77, %c0_78] : memref<32x32xf32, #tpu.memory_space<vmem>>, vector<32x32xf32>
    %cst_79 = arith.constant dense<0.000000e+00> : vector<8x32xf32>
    %192 = tpu.matmul %190, %191, %cst_79 {dimension_numbers = #tpu.dot_dimension_numbers<[1], [0], [0], [1], [0, 0, 1, 1], [], []>} : vector<8x32xf32>, vector<32x32xf32>, vector<8x32xf32> -> vector<8x32xf32>
    %c0_80 = arith.constant 0 : index
    %c0_81 = arith.constant 0 : index
    %193 = vector.load %arg24[%c0_80, %c0_81] : memref<1x32xf32, #tpu.memory_space<vmem>>, vector<1x32xf32>
    %194 = vector.broadcast %193 : vector<1x32xf32> to vector<8x32xf32>
    %195 = arith.addf %192, %194 : vector<8x32xf32>
    %c0_82 = arith.constant 0 : index
    %c0_83 = arith.constant 0 : index
    %196 = vector.load %arg25[%c0_82, %c0_83] : memref<8x32xf32, #tpu.memory_space<vmem>>, vector<8x32xf32>
    tpu.vector_store %arg25[%c0_82, %c0_83], %195 {strides = array<i32>} : memref<8x32xf32, #tpu.memory_space<vmem>>, vector<8x32xf32>,
    return
  }
  func.func @transform_0(%arg0: i32, %arg1: memref<1xi32, #tpu.memory_space<smem>>) -> (i32, i32) {
    %c0_i32 = arith.constant 0 : i32
    %c0_i32_0 = arith.constant 0 : i32
    return %arg0, %c0_i32 : i32, i32
  }
  func.func @transform_1(%arg0: i32, %arg1: memref<1xi32, #tpu.memory_space<smem>>) -> (i32, i32) {
    %c0_i32 = arith.constant 0 : i32
    %c0_i32_0 = arith.constant 0 : i32
    %c0_i32_1 = arith.constant 0 : i32
    return %c0_i32, %c0_i32_0 : i32, i32
  }
  func.func @transform_2(%arg0: i32, %arg1: memref<1xi32, #tpu.memory_space<smem>>) -> (i32, i32) {
    %c0_i32 = arith.constant 0 : i32
    %c0_i32_0 = arith.constant 0 : i32
    %c0_i32_1 = arith.constant 0 : i32
    return %c0_i32, %c0_i32_0 : i32, i32
  }
  func.func @transform_3(%arg0: i32, %arg1: memref<1xi32, #tpu.memory_space<smem>>) -> (i32, i32) {
    %c0_i32 = arith.constant 0 : i32
    %c0_i32_0 = arith.constant 0 : i32
    %c0_i32_1 = arith.constant 0 : i32
    return %c0_i32, %c0_i32_0 : i32, i32
  }
  func.func @transform_4(%arg0: i32, %arg1: memref<1xi32, #tpu.memory_space<smem>>) -> (i32, i32) {
    %c0_i32 = arith.constant 0 : i32
    %c0_i32_0 = arith.constant 0 : i32
    %c0_i32_1 = arith.constant 0 : i32
    return %c0_i32, %c0_i32_0 : i32, i32
  }
  func.func @transform_5(%arg0: i32, %arg1: memref<1xi32, #tpu.memory_space<smem>>) -> (i32, i32) {
    %c0_i32 = arith.constant 0 : i32
    %c0_i32_0 = arith.constant 0 : i32
    %c0_i32_1 = arith.constant 0 : i32
    return %c0_i32, %c0_i32_0 : i32, i32
  }
  func.func @transform_6(%arg0: i32, %arg1: memref<1xi32, #tpu.memory_space<smem>>) -> (i32, i32) {
    %c0_i32 = arith.constant 0 : i32
    %c0_i32_0 = arith.constant 0 : i32
    %c0_i32_1 = arith.constant 0 : i32
    return %c0_i32, %c0_i32_0 : i32, i32
  }
  func.func @transform_7(%arg0: i32, %arg1: memref<1xi32, #tpu.memory_space<smem>>) -> (i32, i32) {
    %c0_i32 = arith.constant 0 : i32
    %c0_i32_0 = arith.constant 0 : i32
    %c0_i32_1 = arith.constant 0 : i32
    return %c0_i32, %c0_i32_0 : i32, i32
  }
  func.func @transform_8(%arg0: i32, %arg1: memref<1xi32, #tpu.memory_space<smem>>) -> (i32, i32) {
    %c0_i32 = arith.constant 0 : i32
    %c0_i32_0 = arith.constant 0 : i32
    %c0_i32_1 = arith.constant 0 : i32
    return %c0_i32, %c0_i32_0 : i32, i32
  }
  func.func @transform_9(%arg0: i32, %arg1: memref<1xi32, #tpu.memory_space<smem>>) -> (i32, i32) {
    %c0_i32 = arith.constant 0 : i32
    %c0_i32_0 = arith.constant 0 : i32
    %c0_i32_1 = arith.constant 0 : i32
    return %c0_i32, %c0_i32_0 : i32, i32
  }
  func.func @transform_10(%arg0: i32, %arg1: memref<1xi32, #tpu.memory_space<smem>>) -> (i32, i32) {
    %c0_i32 = arith.constant 0 : i32
    %c0_i32_0 = arith.constant 0 : i32
    %c0_i32_1 = arith.constant 0 : i32
    return %c0_i32, %c0_i32_0 : i32, i32
  }
  func.func @transform_11(%arg0: i32, %arg1: memref<1xi32, #tpu.memory_space<smem>>) -> (i32, i32) {
    %c0_i32 = arith.constant 0 : i32
    %c0_i32_0 = arith.constant 0 : i32
    %c0_i32_1 = arith.constant 0 : i32
    return %c0_i32, %c0_i32_0 : i32, i32
  }
  func.func @transform_12(%arg0: i32, %arg1: memref<1xi32, #tpu.memory_space<smem>>) -> (i32, i32) {
    %c0_i32 = arith.constant 0 : i32
    %c0_i32_0 = arith.constant 0 : i32
    %c0_i32_1 = arith.constant 0 : i32
    return %c0_i32, %c0_i32_0 : i32, i32
  }
  func.func @transform_13(%arg0: i32, %arg1: memref<1xi32, #tpu.memory_space<smem>>) -> (i32, i32) {
    %c0_i32 = arith.constant 0 : i32
    %c0_i32_0 = arith.constant 0 : i32
    %c0_i32_1 = arith.constant 0 : i32
    return %c0_i32, %c0_i32_0 : i32, i32
  }
  func.func @transform_14(%arg0: i32, %arg1: memref<1xi32, #tpu.memory_space<smem>>) -> (i32, i32) {
    %c0_i32 = arith.constant 0 : i32
    %c0_i32_0 = arith.constant 0 : i32
    %c0_i32_1 = arith.constant 0 : i32
    return %c0_i32, %c0_i32_0 : i32, i32
  }
  func.func @transform_15(%arg0: i32, %arg1: memref<1xi32, #tpu.memory_space<smem>>) -> (i32, i32) {
    %c0_i32 = arith.constant 0 : i32
    %c0_i32_0 = arith.constant 0 : i32
    %c0_i32_1 = arith.constant 0 : i32
    return %c0_i32, %c0_i32_0 : i32, i32
  }
  func.func @transform_16(%arg0: i32, %arg1: memref<1xi32, #tpu.memory_space<smem>>) -> (i32, i32) {
    %c0_i32 = arith.constant 0 : i32
    %c0_i32_0 = arith.constant 0 : i32
    %c0_i32_1 = arith.constant 0 : i32
    return %c0_i32, %c0_i32_0 : i32, i32
  }
  func.func @transform_17(%arg0: i32, %arg1: memref<1xi32, #tpu.memory_space<smem>>) -> (i32, i32) {
    %c0_i32 = arith.constant 0 : i32
    %c0_i32_0 = arith.constant 0 : i32
    %c0_i32_1 = arith.constant 0 : i32
    return %c0_i32, %c0_i32_0 : i32, i32
  }
  func.func @transform_18(%arg0: i32, %arg1: memref<1xi32, #tpu.memory_space<smem>>) -> (i32, i32) {
    %c0_i32 = arith.constant 0 : i32
    %c0_i32_0 = arith.constant 0 : i32
    %c0_i32_1 = arith.constant 0 : i32
    return %c0_i32, %c0_i32_0 : i32, i32
  }
  func.func @transform_19(%arg0: i32, %arg1: memref<1xi32, #tpu.memory_space<smem>>) -> (i32, i32) {
    %c0_i32 = arith.constant 0 : i32
    %c0_i32_0 = arith.constant 0 : i32
    %c0_i32_1 = arith.constant 0 : i32
    return %c0_i32, %c0_i32_0 : i32, i32
  }
  func.func @transform_20(%arg0: i32, %arg1: memref<1xi32, #tpu.memory_space<smem>>) -> (i32, i32) {
    %c0_i32 = arith.constant 0 : i32
    %c0_i32_0 = arith.constant 0 : i32
    %c0_i32_1 = arith.constant 0 : i32
    return %c0_i32, %c0_i32_0 : i32, i32
  }
  func.func @transform_21(%arg0: i32, %arg1: memref<1xi32, #tpu.memory_space<smem>>) -> (i32, i32) {
    %c0_i32 = arith.constant 0 : i32
    %c0_i32_0 = arith.constant 0 : i32
    %c0_i32_1 = arith.constant 0 : i32
    return %c0_i32, %c0_i32_0 : i32, i32
  }
  func.func @transform_22(%arg0: i32, %arg1: memref<1xi32, #tpu.memory_space<smem>>) -> (i32, i32) {
    %c0_i32 = arith.constant 0 : i32
    %c0_i32_0 = arith.constant 0 : i32
    %c0_i32_1 = arith.constant 0 : i32
    return %c0_i32, %c0_i32_0 : i32, i32
  }
  func.func @transform_23(%arg0: i32, %arg1: memref<1xi32, #tpu.memory_space<smem>>) -> (i32, i32) {
    %c0_i32 = arith.constant 0 : i32
    %c0_i32_0 = arith.constant 0 : i32
    return %arg0, %c0_i32 : i32, i32
  }
}

</mosaic_0001>

<llo_original>
// kernel: tpu_custom_call.1
$region0: #{tpu_custom_call.1}
  #allocation0 [shape = 'u32[]', space=smem, size = 0x4, offset = 0x4, fixed_abs, tag = 'smem constant byte address 0x4 - core index']
  #allocation1 [shape = 'u32[144,128]{1,0:T(1,128)}', space=vmem, size = 0x12000, scoped, tag = 'internal scratch']
  #allocation2 [shape = 's32[1]{0}', space=sflag, size = 0x4, scoped, tag = 'scoped memory for tpu_custom_call.1']
  #allocation3 [shape = 's32[1]{0:T(128)S(6)}', space=smem, size = 0x200, scoped, tag = 'prefetched SMEM operand 0']
  %s0 = inlined_call_operand.<no memory space> [shape: s32[1], index: 0, kind: input, shape index: {}]
  %s1 = inlined_call_operand.hbm [shape: f32[8,64], index: 1, kind: input, shape index: {}]
  %s2 = inlined_call_operand.vmem [shape: f32[64,32], index: 2, kind: input, shape index: {}]
  %s3 = inlined_call_operand.hbm [shape: f32[1,32], index: 3, kind: input, shape index: {}]
  %s4 = inlined_call_operand.hbm [shape: f32[1,32], index: 4, kind: input, shape index: {}]
  %s5 = inlined_call_operand.hbm [shape: f32[1,32], index: 5, kind: input, shape index: {}]
  %s6 = inlined_call_operand.vmem [shape: f32[32,32], index: 6, kind: input, shape index: {}]
  %s7 = inlined_call_operand.hbm [shape: f32[1,32], index: 7, kind: input, shape index: {}]
  %s8 = inlined_call_operand.hbm [shape: f32[1,32], index: 8, kind: input, shape index: {}]
  %s9 = inlined_call_operand.hbm [shape: f32[1,32], index: 9, kind: input, shape index: {}]
  %s10 = inlined_call_operand.vmem [shape: f32[32,32], index: 10, kind: input, shape index: {}]
  %s11 = inlined_call_operand.hbm [shape: f32[1,32], index: 11, kind: input, shape index: {}]
  %s12 = inlined_call_operand.hbm [shape: f32[1,32], index: 12, kind: input, shape index: {}]
  %s13 = inlined_call_operand.hbm [shape: f32[1,32], index: 13, kind: input, shape index: {}]
  %s14 = inlined_call_operand.vmem [shape: f32[32,32], index: 14, kind: input, shape index: {}]
  %s15 = inlined_call_operand.hbm [shape: f32[1,32], index: 15, kind: input, shape index: {}]
  %s16 = inlined_call_operand.hbm [shape: f32[1,32], index: 16, kind: input, shape index: {}]
  %s17 = inlined_call_operand.hbm [shape: f32[1,32], index: 17, kind: input, shape index: {}]
  %s18 = inlined_call_operand.vmem [shape: f32[32,32], index: 18, kind: input, shape index: {}]
  %s19 = inlined_call_operand.vmem [shape: f32[1,32], index: 19, kind: input, shape index: {}]
  %s20 = inlined_call_operand.vmem [shape: f32[1,32], index: 20, kind: input, shape index: {}]
  %s21 = inlined_call_operand.vmem [shape: f32[1,32], index: 21, kind: input, shape index: {}]
  %s22 = inlined_call_operand.vmem [shape: f32[32,32], index: 22, kind: input, shape index: {}]
  %s23 = inlined_call_operand.vmem [shape: f32[1,32], index: 23, kind: input, shape index: {}]
  %s24 = inlined_call_operand.hbm [shape: f32[8,32], index: 24, kind: output, shape index: {}]
  %s25 = sld [smem:[#allocation0]]
  $region154: #{tpu_custom_call.1} parent=0
    _
  %s27 = ssub.s32 1, %s25
  %s28 = scalar_select 0, %s27, %s25
  %29 = sst [smem:[#allocation3]] %s0
  $region1: #{tpu_custom_call.1} parent=0
    #allocation4 [shape = 'u8[4096]{0}', space=vmem, size = 0x1000, scoped, tag = 'input window, operand 1, single buffered']
    #allocation5 [shape = 's32[1]{0}', space=sflag, size = 0x4, scoped, tag = 'scoped memory for tpu_custom_call.1']
    #allocation6 [shape = 's32[1]{0}', space=sflag, size = 0x4, scoped, tag = 'scoped memory for tpu_custom_call.1']
    #allocation7 [shape = 'u8[512]{0}', space=vmem, size = 0x400, scoped, tag = 'input window, operand 3, single buffered']
    #allocation8 [shape = 's32[1]{0}', space=sflag, size = 0x4, scoped, tag = 'scoped memory for tpu_custom_call.1']
    #allocation9 [shape = 'u8[512]{0}', space=vmem, size = 0x400, scoped, tag = 'input window, operand 4, single buffered']
    #allocation10 [shape = 'u8[512]{0}', space=vmem, size = 0x400, scoped, tag = 'input window, operand 5, single buffered']
    #allocation11 [shape = 's32[1]{0}', space=sflag, size = 0x4, scoped, tag = 'scoped memory for tpu_custom_call.1']
    #allocation12 [shape = 'u8[512]{0}', space=vmem, size = 0x400, scoped, tag = 'input window, operand 7, single buffered']
    #allocation13 [shape = 'u8[512]{0}', space=vmem, size = 0x400, scoped, tag = 'input window, operand 8, single buffered']
    #allocation14 [shape = 's32[1]{0}', space=sflag, size = 0x4, scoped, tag = 'scoped memory for tpu_custom_call.1']
    #allocation15 [shape = 'u8[512]{0}', space=vmem, size = 0x400, scoped, tag = 'input window, operand 9, single buffered']
    #allocation16 [shape = 'u8[512]{0}', space=vmem, size = 0x400, scoped, tag = 'input window, operand 11, single buffered']
    #allocation17 [shape = 's32[1]{0}', space=sflag, size = 0x4, scoped, tag = 'scoped memory for tpu_custom_call.1']
    #allocation18 [shape = 'u8[512]{0}', space=vmem, size = 0x400, scoped, tag = 'input window, operand 12, single buffered']
    #allocation19 [shape = 'u8[512]{0}', space=vmem, size = 0x400, scoped, tag = 'input window, operand 13, single buffered']
    #allocation20 [shape = 's32[1]{0}', space=sflag, size = 0x4, scoped, tag = 'scoped memory for tpu_custom_call.1']
    #allocation21 [shape = 'u8[512]{0}', space=vmem, size = 0x400, scoped, tag = 'input window, operand 15, single buffered']
    #allocation22 [shape = 'u8[512]{0}', space=vmem, size = 0x400, scoped, tag = 'input window, operand 16, single buffered']
    #allocation23 [shape = 's32[1]{0}', space=sflag, size = 0x4, scoped, tag = 'scoped memory for tpu_custom_call.1']
    #allocation24 [shape = 'u8[512]{0}', space=vmem, size = 0x400, scoped, tag = 'input window, operand 17, single buffered']
    #allocation25 [shape = 'u8[4096]{0}', space=vmem, size = 0x1000, scoped, tag = 'output window, operand 0, single buffered']
    %30 = vsyncpa [#allocation5], 0
    %31 = vsyncpa [#allocation8], 0
    %32 = vsyncpa [#allocation11], 0
    %33 = vsyncpa [#allocation14], 0
    %34 = vsyncpa [#allocation17], 0
    %35 = vsyncpa [#allocation20], 0
    %36 = vsyncpa [#allocation23], 0
    %37 = vsyncpa [#allocation6], 0
    // Predicated region
    $region2: #{tpu_custom_call.1} parent=1 // pred_check
      _
    $region3: #{tpu_custom_call.1} parent=1 // pred_check_branch
      %39 = sbr.rel (0) target = $region5
    $region4: #{tpu_custom_call.1} parent=1 // pred_region
      %s41 = ssub.s32 128, 128
      %42 = vsyncadd [#allocation5], %s41
      %s44 = sshll.u32 [#allocation4], 4
      %s45 = int_to_ptr.vmem [resolvable:$true] %s44
      %47 = dma.hbm_to_vmem [thread:$0]  %s1, 128, %s45, [#allocation5]
    $region5: #{tpu_custom_call.1} parent=1 // pred_fallthru
      _
    // Predicated region
    $region6: #{tpu_custom_call.1} parent=1 // pred_check
      _
    $region7: #{tpu_custom_call.1} parent=1 // pred_check_branch
      %49 = sbr.rel (0) target = $region9
    $region8: #{tpu_custom_call.1} parent=1 // pred_region
      _
    $region9: #{tpu_custom_call.1} parent=1 // pred_fallthru
      _
    // Predicated region
    $region10: #{tpu_custom_call.1} parent=1 // pred_check
      _
    $region11: #{tpu_custom_call.1} parent=1 // pred_check_branch
      %51 = sbr.rel (0) target = $region13
    $region12: #{tpu_custom_call.1} parent=1 // pred_region
      %s53 = ssub.s32 16, 16
      %54 = vsyncadd [#allocation8], %s53
      %s56 = sshll.u32 [#allocation7], 4
      %s57 = int_to_ptr.vmem [resolvable:$true] %s56
      %59 = dma.hbm_to_vmem [thread:$0]  %s3, 16, %s57, [#allocation8]
    $region13: #{tpu_custom_call.1} parent=1 // pred_fallthru
      _
    // Predicated region
    $region14: #{tpu_custom_call.1} parent=1 // pred_check
      _
    $region15: #{tpu_custom_call.1} parent=1 // pred_check_branch
      %61 = sbr.rel (0) target = $region17
    $region16: #{tpu_custom_call.1} parent=1 // pred_region
      %s63 = ssub.s32 16, 16
      %64 = vsyncadd [#allocation8], %s63
      %s66 = sshll.u32 [#allocation9], 4
      %s67 = int_to_ptr.vmem [resolvable:$true] %s66
      %69 = dma.hbm_to_vmem [thread:$0]  %s4, 16, %s67, [#allocation8]
    $region17: #{tpu_custom_call.1} parent=1 // pred_fallthru
      _
    // Predicated region
    $region18: #{tpu_custom_call.1} parent=1 // pred_check
      _
    $region19: #{tpu_custom_call.1} parent=1 // pred_check_branch
      %71 = sbr.rel (0) target = $region21
    $region20: #{tpu_custom_call.1} parent=1 // pred_region
      %s73 = ssub.s32 16, 16
      %74 = vsyncadd [#allocation11], %s73
      %s76 = sshll.u32 [#allocation10], 4
      %s77 = int_to_ptr.vmem [resolvable:$true] %s76
      %79 = dma.hbm_to_vmem [thread:$0]  %s5, 16, %s77, [#allocation11]
    $region21: #{tpu_custom_call.1} parent=1 // pred_fallthru
      _
    // Predicated region
    $region22: #{tpu_custom_call.1} parent=1 // pred_check
      _
    $region23: #{tpu_custom_call.1} parent=1 // pred_check_branch
      %81 = sbr.rel (0) target = $region25
    $region24: #{tpu_custom_call.1} parent=1 // pred_region
      _
    $region25: #{tpu_custom_call.1} parent=1 // pred_fallthru
      _
    // Predicated region
    $region26: #{tpu_custom_call.1} parent=1 // pred_check
      _
    $region27: #{tpu_custom_call.1} parent=1 // pred_check_branch
      %83 = sbr.rel (0) target = $region29
    $region28: #{tpu_custom_call.1} parent=1 // pred_region
      %s85 = ssub.s32 16, 16
      %86 = vsyncadd [#allocation11], %s85
      %s88 = sshll.u32 [#allocation12], 4
      %s89 = int_to_ptr.vmem [resolvable:$true] %s88
      %91 = dma.hbm_to_vmem [thread:$0]  %s7, 16, %s89, [#allocation11]
    $region29: #{tpu_custom_call.1} parent=1 // pred_fallthru
      _
    // Predicated region
    $region30: #{tpu_custom_call.1} parent=1 // pred_check
      _
    $region31: #{tpu_custom_call.1} parent=1 // pred_check_branch
      %93 = sbr.rel (0) target = $region33
    $region32: #{tpu_custom_call.1} parent=1 // pred_region
      %s95 = ssub.s32 16, 16
      %96 = vsyncadd [#allocation14], %s95
      %s98 = sshll.u32 [#allocation13], 4
      %s99 = int_to_ptr.vmem [resolvable:$true] %s98
      %101 = dma.hbm_to_vmem [thread:$0]  %s8, 16, %s99, [#allocation14]
    $region33: #{tpu_custom_call.1} parent=1 // pred_fallthru
      _
    // Predicated region
    $region34: #{tpu_custom_call.1} parent=1 // pred_check
      _
    $region35: #{tpu_custom_call.1} parent=1 // pred_check_branch
      %103 = sbr.rel (0) target = $region37
    $region36: #{tpu_custom_call.1} parent=1 // pred_region
      %s105 = ssub.s32 16, 16
      %106 = vsyncadd [#allocation14], %s105
      %s108 = sshll.u32 [#allocation15], 4
      %s109 = int_to_ptr.vmem [resolvable:$true] %s108
      %111 = dma.hbm_to_vmem [thread:$0]  %s9, 16, %s109, [#allocation14]
    $region37: #{tpu_custom_call.1} parent=1 // pred_fallthru
      _
    // Predicated region
    $region38: #{tpu_custom_call.1} parent=1 // pred_check
      _
    $region39: #{tpu_custom_call.1} parent=1 // pred_check_branch
      %113 = sbr.rel (0) target = $region41
    $region40: #{tpu_custom_call.1} parent=1 // pred_region
      _
    $region41: #{tpu_custom_call.1} parent=1 // pred_fallthru
      _
    // Predicated region
    $region42: #{tpu_custom_call.1} parent=1 // pred_check
      _
    $region43: #{tpu_custom_call.1} parent=1 // pred_check_branch
      %115 = sbr.rel (0) target = $region45
    $region44: #{tpu_custom_call.1} parent=1 // pred_region
      %s117 = ssub.s32 16, 16
      %118 = vsyncadd [#allocation17], %s117
      %s120 = sshll.u32 [#allocation16], 4
      %s121 = int_to_ptr.vmem [resolvable:$true] %s120
      %123 = dma.hbm_to_vmem [thread:$0]  %s11, 16, %s121, [#allocation17]
    $region45: #{tpu_custom_call.1} parent=1 // pred_fallthru
      _
    // Predicated region
    $region46: #{tpu_custom_call.1} parent=1 // pred_check
      _
    $region47: #{tpu_custom_call.1} parent=1 // pred_check_branch
      %125 = sbr.rel (0) target = $region49
    $region48: #{tpu_custom_call.1} parent=1 // pred_region
      %s127 = ssub.s32 16, 16
      %128 = vsyncadd [#allocation17], %s127
      %s130 = sshll.u32 [#allocation18], 4
      %s131 = int_to_ptr.vmem [resolvable:$true] %s130
      %133 = dma.hbm_to_vmem [thread:$0]  %s12, 16, %s131, [#allocation17]
    $region49: #{tpu_custom_call.1} parent=1 // pred_fallthru
      _
    // Predicated region
    $region50: #{tpu_custom_call.1} parent=1 // pred_check
      _
    $region51: #{tpu_custom_call.1} parent=1 // pred_check_branch
      %135 = sbr.rel (0) target = $region53
    $region52: #{tpu_custom_call.1} parent=1 // pred_region
      %s137 = ssub.s32 16, 16
      %138 = vsyncadd [#allocation20], %s137
      %s140 = sshll.u32 [#allocation19], 4
      %s141 = int_to_ptr.vmem [resolvable:$true] %s140
      %143 = dma.hbm_to_vmem [thread:$0]  %s13, 16, %s141, [#allocation20]
    $region53: #{tpu_custom_call.1} parent=1 // pred_fallthru
      _
    // Predicated region
    $region54: #{tpu_custom_call.1} parent=1 // pred_check
      _
    $region55: #{tpu_custom_call.1} parent=1 // pred_check_branch
      %145 = sbr.rel (0) target = $region57
    $region56: #{tpu_custom_call.1} parent=1 // pred_region
      _
    $region57: #{tpu_custom_call.1} parent=1 // pred_fallthru
      _
    // Predicated region
    $region58: #{tpu_custom_call.1} parent=1 // pred_check
      _
    $region59: #{tpu_custom_call.1} parent=1 // pred_check_branch
      %147 = sbr.rel (0) target = $region61
    $region60: #{tpu_custom_call.1} parent=1 // pred_region
      %s149 = ssub.s32 16, 16
      %150 = vsyncadd [#allocation20], %s149
      %s152 = sshll.u32 [#allocation21], 4
      %s153 = int_to_ptr.vmem [resolvable:$true] %s152
      %155 = dma.hbm_to_vmem [thread:$0]  %s15, 16, %s153, [#allocation20]
    $region61: #{tpu_custom_call.1} parent=1 // pred_fallthru
      _
    // Predicated region
    $region62: #{tpu_custom_call.1} parent=1 // pred_check
      _
    $region63: #{tpu_custom_call.1} parent=1 // pred_check_branch
      %157 = sbr.rel (0) target = $region65
    $region64: #{tpu_custom_call.1} parent=1 // pred_region
      %s159 = ssub.s32 16, 16
      %160 = vsyncadd [#allocation23], %s159
      %s162 = sshll.u32 [#allocation22], 4
      %s163 = int_to_ptr.vmem [resolvable:$true] %s162
      %165 = dma.hbm_to_vmem [thread:$0]  %s16, 16, %s163, [#allocation23]
    $region65: #{tpu_custom_call.1} parent=1 // pred_fallthru
      _
    // Predicated region
    $region66: #{tpu_custom_call.1} parent=1 // pred_check
      _
    $region67: #{tpu_custom_call.1} parent=1 // pred_check_branch
      %167 = sbr.rel (0) target = $region69
    $region68: #{tpu_custom_call.1} parent=1 // pred_region
      %s169 = ssub.s32 16, 16
      %170 = vsyncadd [#allocation23], %s169
      %s172 = sshll.u32 [#allocation24], 4
      %s173 = int_to_ptr.vmem [resolvable:$true] %s172
      %175 = dma.hbm_to_vmem [thread:$0]  %s17, 16, %s173, [#allocation23]
    $region69: #{tpu_custom_call.1} parent=1 // pred_fallthru
      _
    // Predicated region
    $region70: #{tpu_custom_call.1} parent=1 // pred_check
      _
    $region71: #{tpu_custom_call.1} parent=1 // pred_check_branch
      %177 = sbr.rel (0) target = $region73
    $region72: #{tpu_custom_call.1} parent=1 // pred_region
      _
    $region73: #{tpu_custom_call.1} parent=1 // pred_fallthru
      _
    // Predicated region
    $region74: #{tpu_custom_call.1} parent=1 // pred_check
      _
    $region75: #{tpu_custom_call.1} parent=1 // pred_check_branch
      %179 = sbr.rel (0) target = $region77
    $region76: #{tpu_custom_call.1} parent=1 // pred_region
      _
    $region77: #{tpu_custom_call.1} parent=1 // pred_fallthru
      _
    // Predicated region
    $region78: #{tpu_custom_call.1} parent=1 // pred_check
      _
    $region79: #{tpu_custom_call.1} parent=1 // pred_check_branch
      %181 = sbr.rel (0) target = $region81
    $region80: #{tpu_custom_call.1} parent=1 // pred_region
      _
    $region81: #{tpu_custom_call.1} parent=1 // pred_fallthru
      _
    // Predicated region
    $region82: #{tpu_custom_call.1} parent=1 // pred_check
      _
    $region83: #{tpu_custom_call.1} parent=1 // pred_check_branch
      %183 = sbr.rel (0) target = $region85
    $region84: #{tpu_custom_call.1} parent=1 // pred_region
      _
    $region85: #{tpu_custom_call.1} parent=1 // pred_fallthru
      _
    // Predicated region
    $region86: #{tpu_custom_call.1} parent=1 // pred_check
      _
    $region87: #{tpu_custom_call.1} parent=1 // pred_check_branch
      %185 = sbr.rel (0) target = $region89
    $region88: #{tpu_custom_call.1} parent=1 // pred_region
      _
    $region89: #{tpu_custom_call.1} parent=1 // pred_fallthru
      _
    // Predicated region
    $region90: #{tpu_custom_call.1} parent=1 // pred_check
      _
    $region91: #{tpu_custom_call.1} parent=1 // pred_check_branch
      %187 = sbr.rel (0) target = $region93
    $region92: #{tpu_custom_call.1} parent=1 // pred_region
      _
    $region93: #{tpu_custom_call.1} parent=1 // pred_fallthru
      _
    // Predicated region
    $region94: #{tpu_custom_call.1} parent=1 // pred_check
      _
    $region95: #{tpu_custom_call.1} parent=1 // pred_check_branch
      %189 = sbr.rel (0) target = $region97
    $region96: #{tpu_custom_call.1} parent=1 // pred_region
      %190 = dma.done [#allocation5], 128
    $region97: #{tpu_custom_call.1} parent=1 // pred_fallthru
      _
    // Predicated region
    $region98: #{tpu_custom_call.1} parent=1 // pred_check
      _
    $region99: #{tpu_custom_call.1} parent=1 // pred_check_branch
      %192 = sbr.rel (0) target = $region101
    $region100: #{tpu_custom_call.1} parent=1 // pred_region
      %193 = dma.done [#allocation8], 16
    $region101: #{tpu_custom_call.1} parent=1 // pred_fallthru
      _
    // Predicated region
    $region102: #{tpu_custom_call.1} parent=1 // pred_check
      _
    $region103: #{tpu_custom_call.1} parent=1 // pred_check_branch
      %195 = sbr.rel (0) target = $region105
    $region104: #{tpu_custom_call.1} parent=1 // pred_region
      %196 = dma.done [#allocation8], 16
    $region105: #{tpu_custom_call.1} parent=1 // pred_fallthru
      _
    // Predicated region
    $region106: #{tpu_custom_call.1} parent=1 // pred_check
      _
    $region107: #{tpu_custom_call.1} parent=1 // pred_check_branch
      %198 = sbr.rel (0) target = $region109
    $region108: #{tpu_custom_call.1} parent=1 // pred_region
      %199 = dma.done [#allocation11], 16
    $region109: #{tpu_custom_call.1} parent=1 // pred_fallthru
      _
    // Predicated region
    $region110: #{tpu_custom_call.1} parent=1 // pred_check
      _
    $region111: #{tpu_custom_call.1} parent=1 // pred_check_branch
      %201 = sbr.rel (0) target = $region113
    $region112: #{tpu_custom_call.1} parent=1 // pred_region
      %202 = dma.done [#allocation11], 16
    $region113: #{tpu_custom_call.1} parent=1 // pred_fallthru
      _
    // Predicated region
    $region114: #{tpu_custom_call.1} parent=1 // pred_check
      _
    $region115: #{tpu_custom_call.1} parent=1 // pred_check_branch
      %204 = sbr.rel (0) target = $region117
    $region116: #{tpu_custom_call.1} parent=1 // pred_region
      %205 = dma.done [#allocation14], 16
    $region117: #{tpu_custom_call.1} parent=1 // pred_fallthru
      _
    // Predicated region
    $region118: #{tpu_custom_call.1} parent=1 // pred_check
      _
    $region119: #{tpu_custom_call.1} parent=1 // pred_check_branch
      %207 = sbr.rel (0) target = $region121
    $region120: #{tpu_custom_call.1} parent=1 // pred_region
      %208 = dma.done [#allocation14], 16
    $region121: #{tpu_custom_call.1} parent=1 // pred_fallthru
      _
    // Predicated region
    $region122: #{tpu_custom_call.1} parent=1 // pred_check
      _
    $region123: #{tpu_custom_call.1} parent=1 // pred_check_branch
      %210 = sbr.rel (0) target = $region125
    $region124: #{tpu_custom_call.1} parent=1 // pred_region
      %211 = dma.done [#allocation17], 16
    $region125: #{tpu_custom_call.1} parent=1 // pred_fallthru
      _
    // Predicated region
    $region126: #{tpu_custom_call.1} parent=1 // pred_check
      _
    $region127: #{tpu_custom_call.1} parent=1 // pred_check_branch
      %213 = sbr.rel (0) target = $region129
    $region128: #{tpu_custom_call.1} parent=1 // pred_region
      %214 = dma.done [#allocation17], 16
    $region129: #{tpu_custom_call.1} parent=1 // pred_fallthru
      _
    // Predicated region
    $region130: #{tpu_custom_call.1} parent=1 // pred_check
      _
    $region131: #{tpu_custom_call.1} parent=1 // pred_check_branch
      %216 = sbr.rel (0) target = $region133
    $region132: #{tpu_custom_call.1} parent=1 // pred_region
      %217 = dma.done [#allocation20], 16
    $region133: #{tpu_custom_call.1} parent=1 // pred_fallthru
      _
    // Predicated region
    $region134: #{tpu_custom_call.1} parent=1 // pred_check
      _
    $region135: #{tpu_custom_call.1} parent=1 // pred_check_branch
      %219 = sbr.rel (0) target = $region137
    $region136: #{tpu_custom_call.1} parent=1 // pred_region
      %220 = dma.done [#allocation20], 16
    $region137: #{tpu_custom_call.1} parent=1 // pred_fallthru
      _
    // Predicated region
    $region138: #{tpu_custom_call.1} parent=1 // pred_check
      _
    $region139: #{tpu_custom_call.1} parent=1 // pred_check_branch
      %222 = sbr.rel (0) target = $region141
    $region140: #{tpu_custom_call.1} parent=1 // pred_region
      %223 = dma.done [#allocation23], 16
    $region141: #{tpu_custom_call.1} parent=1 // pred_fallthru
      _
    // Predicated region
    $region142: #{tpu_custom_call.1} parent=1 // pred_check
      _
    $region143: #{tpu_custom_call.1} parent=1 // pred_check_branch
      %225 = sbr.rel (0) target = $region145
    $region144: #{tpu_custom_call.1} parent=1 // pred_region
      %226 = dma.done [#allocation23], 16
    $region145: #{tpu_custom_call.1} parent=1 // pred_fallthru
      _
    %v227 = vld [vmem:[#allocation4] sm:$0xff]
    %v228 = vmul.f32 %v227, %v227
    %vm229 = vcmask 523264
    %v230 = vsel %vm229, %v228, 0.0
    %231 = vadd.xlane.f32.xlu0 %v230
    %v232 = vpop.xlane.xlu0 %231
    %v233 = vrsqrt.pop %v232
    %v234 = vmul.f32 %v232, %v233
    %vm235 = vcmp.eq.f32.partialorder %v232, inf
    %v236 = vsel %vm235, %v232, %v234
    %vm237 = vcmp.eq.f32.partialorder %v232, 0.0
    %v238 = vand.u32 %v232, 2147483648
    %v239 = vsel %vm237, %v238, %v236
    %v240 = vmax.f32 %v239, 1e-12
    %v241 = vrcp.pop %v240
    %v242 = vmul.f32 %v227, %v241
    %v243 = vld [vmem:[%s2] sm:$0xff]
    %v244 = vld [vmem:[%s2 + $0x8] sm:$0xff]
    %v245 = vld [vmem:[%s2 + $0x10] sm:$0xff]
    %v246 = vld [vmem:[%s2 + $0x18] sm:$0xff]
    %v247 = vld [vmem:[%s2 + $0x20] sm:$0xff]
    %v248 = vld [vmem:[%s2 + $0x28] sm:$0xff]
    %v249 = vld [vmem:[%s2 + $0x30] sm:$0xff]
    %v250 = vld [vmem:[%s2 + $0x38] sm:$0xff]
    %v251 = vld [vmem:[#allocation7] sm:$0x1]
    %v253 = vlaneseq
    %v254 = vshrl.u32 %v253, 7
    %v255 = vsub.s32 0, %v254
    %v256 = vrot.slane %v251, %v255
    %v259 = vsel %vm229, %v242, 0
    %261 = vmatprep.subr.mxu0 0.0
    %262 = vmatpush1.msra.mxu0 %v243
    %263 = vmatprep.subr.mxu0 0.0
    %264 = vmatpush1.msra.mxu0 %v244
    %265 = vmatprep.subr.mxu0 0.0
    %266 = vmatpush1.msra.mxu0 %v245
    %267 = vmatprep.subr.mxu0 0.0
    %268 = vmatpush1.msra.mxu0 %v246
    %269 = vmatprep.subr.mxu0 0.0
    %270 = vmatpush1.msra.mxu0 %v247
    %271 = vmatprep.subr.mxu0 0.0
    %272 = vmatpush1.msra.mxu0 %v248
    %273 = vmatprep.subr.mxu0 0.0
    %274 = vmatpush1.msra.mxu0 %v249
    %275 = vmatprep.subr.mxu0 0.0
    %276 = vmatpush1.msra.mxu0 %v250
    %277 = vmatprep.subr.mxu0 0.0
    %278 = vmatpush1.msra.mxu0 0.0
    %279 = vmatprep.subr.mxu0 0.0
    %280 = vmatpush1.msra.mxu0 0.0
    %281 = vmatprep.subr.mxu0 0.0
    %282 = vmatpush1.msra.mxu0 0.0
    %283 = vmatprep.subr.mxu0 0.0
    %284 = vmatpush1.msra.mxu0 0.0
    %285 = vmatprep.subr.mxu0 0.0
    %286 = vmatpush1.msra.mxu0 0.0
    %287 = vmatprep.subr.mxu0 0.0
    %288 = vmatpush1.msra.mxu0 0.0
    %289 = vmatprep.subr.mxu0 0.0
    %290 = vmatpush1.msra.mxu0 0.0
    %291 = vmatprep.subr.mxu0 0.0
    %292 = vmatpush1.msra.mxu0 0.0
    %293 = vmatprep.subr.mxu0 0.0
    %294 = vmatpush1.msra.mxu0 0.0
    %295 = vmatprep.subr.mxu0 0.0
    %296 = vmatpush1.msra.mxu0 0.0
    %297 = vmatprep.subr.mxu0 0.0
    %298 = vmatpush1.msra.mxu0 0.0
    %299 = vmatprep.subr.mxu0 0.0
    %300 = vmatpush1.msra.mxu0 0.0
    %301 = vmatprep.subr.mxu0 0.0
    %302 = vmatpush1.msra.mxu0 0.0
    %303 = vmatprep.subr.mxu0 0.0
    %304 = vmatpush1.msra.mxu0 0.0
    %305 = vmatprep.subr.mxu0 0.0
    %306 = vmatpush1.msra.mxu0 0.0
    %307 = vmatprep.subr.mxu0 0.0
    %308 = vmatpush1.msra.mxu0 0.0
    %309 = vmatprep.subr.mxu0 0.0
    %310 = vmatpush1.msra.mxu0 0.0
    %311 = vmatprep.subr.mxu0 0.0
    %312 = vmatpush1.msra.mxu0 0.0
    %313 = vmatprep.subr.mxu0 0.0
    %314 = vmatpush1.msra.mxu0 0.0
    %315 = vmatprep.subr.mxu0 0.0
    %316 = vmatpush1.msra.mxu0 0.0
    %317 = vmatprep.subr.mxu0 0.0
    %318 = vmatpush1.msra.mxu0 0.0
    %319 = vmatprep.subr.mxu0 0.0
    %320 = vmatpush1.msra.mxu0 0.0
    %321 = vmatprep.subr.mxu0 0.0
    %322 = vmatpush1.msra.mxu0 0.0
    %323 = vmatprep.subr.mxu0 0.0
    %324 = vmatpush1.msra.mxu0 0.0
    %325 = vmatprep.mubr.f32.mxu0 0.0
    %326 = vmatmul.mubr.f32.gmra.mrb[0].mxu0 %v259
    %v327 = vpop.f32.mrb[0].mxu0
    %v328 = vadd.f32 %v256, %v327
    %v329 = vpop.f32.mrb[0].mxu0
    %330 = vdwg.mxu0
    %v331 = vxor.u32 %v328, 2147483648
    %v332 = vmul.f32 %v331, 1.442695
    %v333 = vpow.pop %v332
    %v334 = vadd.f32 %v333, 1.0
    %v335 = vrcp.pop %v334
    %v336 = vmul.f32 1.0, %v335
    %v337 = vmul.f32 %v328, %v336
    %vm338 = vcmask 261120
    %v339 = vsel %vm338, %v337, 0.0
    %340 = vadd.xlane.f32.xlu0 %v339
    %v341 = vpop.xlane.xlu0 %340
    %v342 = vrcp.pop 32.0
    %v343 = vmul.f32 %v341, %v342
    %v344 = vsub.f32 %v337, %v343
    %v345 = vmul.f32 %v344, %v344
    %v346 = vsel %vm338, %v345, 0.0
    %347 = vadd.xlane.f32.xlu0 %v346
    %v348 = vpop.xlane.xlu0 %347
    %v349 = vmul.f32 %v348, %v342
    %v350 = vadd.f32 %v349, 0.1
    %v351 = vrsqrt.pop %v350
    %v352 = vmul.f32 %v344, %v351
    %v353 = vld [vmem:[#allocation9] sm:$0x1]
    %v355 = vlaneseq
    %v356 = vshrl.u32 %v355, 7
    %v357 = vsub.s32 0, %v356
    %v358 = vrot.slane %v353, %v357
    %v360 = vmul.f32 %v352, %v358
    %v361 = vld [vmem:[#allocation10] sm:$0x1]
    %v363 = vlaneseq
    %v364 = vshrl.u32 %v363, 7
    %v365 = vsub.s32 0, %v364
    %v366 = vrot.slane %v361, %v365
    %v368 = vadd.f32 %v360, %v366
    %v369 = vld [vmem:[%s6] sm:$0xff]
    %v370 = vld [vmem:[%s6 + $0x8] sm:$0xff]
    %v371 = vld [vmem:[%s6 + $0x10] sm:$0xff]
    %v372 = vld [vmem:[%s6 + $0x18] sm:$0xff]
    %v373 = vld [vmem:[#allocation12] sm:$0x1]
    %v375 = vlaneseq
    %v376 = vshrl.u32 %v375, 7
    %v377 = vsub.s32 0, %v376
    %v378 = vrot.slane %v373, %v377
    %v381 = vsel %vm338, %v368, 0
    %383 = vmatprep.subr.mxu0 0.0
    %384 = vmatpush1.msra.mxu0 %v369
    %385 = vmatprep.subr.mxu0 0.0
    %386 = vmatpush1.msra.mxu0 %v370
    %387 = vmatprep.subr.mxu0 0.0
    %388 = vmatpush1.msra.mxu0 %v371
    %389 = vmatprep.subr.mxu0 0.0
    %390 = vmatpush1.msra.mxu0 %v372
    %391 = vmatprep.subr.mxu0 0.0
    %392 = vmatpush1.msra.mxu0 0.0
    %393 = vmatprep.subr.mxu0 0.0
    %394 = vmatpush1.msra.mxu0 0.0
    %395 = vmatprep.subr.mxu0 0.0
    %396 = vmatpush1.msra.mxu0 0.0
    %397 = vmatprep.subr.mxu0 0.0
    %398 = vmatpush1.msra.mxu0 0.0
    %399 = vmatprep.subr.mxu0 0.0
    %400 = vmatpush1.msra.mxu0 0.0
    %401 = vmatprep.subr.mxu0 0.0
    %402 = vmatpush1.msra.mxu0 0.0
    %403 = vmatprep.subr.mxu0 0.0
    %404 = vmatpush1.msra.mxu0 0.0
    %405 = vmatprep.subr.mxu0 0.0
    %406 = vmatpush1.msra.mxu0 0.0
    %407 = vmatprep.subr.mxu0 0.0
    %408 = vmatpush1.msra.mxu0 0.0
    %409 = vmatprep.subr.mxu0 0.0
    %410 = vmatpush1.msra.mxu0 0.0
    %411 = vmatprep.subr.mxu0 0.0
    %412 = vmatpush1.msra.mxu0 0.0
    %413 = vmatprep.subr.mxu0 0.0
    %414 = vmatpush1.msra.mxu0 0.0
    %415 = vmatprep.subr.mxu0 0.0
    %416 = vmatpush1.msra.mxu0 0.0
    %417 = vmatprep.subr.mxu0 0.0
    %418 = vmatpush1.msra.mxu0 0.0
    %419 = vmatprep.subr.mxu0 0.0
    %420 = vmatpush1.msra.mxu0 0.0
    %421 = vmatprep.subr.mxu0 0.0
    %422 = vmatpush1.msra.mxu0 0.0
    %423 = vmatprep.subr.mxu0 0.0
    %424 = vmatpush1.msra.mxu0 0.0
    %425 = vmatprep.subr.mxu0 0.0
    %426 = vmatpush1.msra.mxu0 0.0
    %427 = vmatprep.subr.mxu0 0.0
    %428 = vmatpush1.msra.mxu0 0.0
    %429 = vmatprep.subr.mxu0 0.0
    %430 = vmatpush1.msra.mxu0 0.0
    %431 = vmatprep.subr.mxu0 0.0
    %432 = vmatpush1.msra.mxu0 0.0
    %433 = vmatprep.subr.mxu0 0.0
    %434 = vmatpush1.msra.mxu0 0.0
    %435 = vmatprep.subr.mxu0 0.0
    %436 = vmatpush1.msra.mxu0 0.0
    %437 = vmatprep.subr.mxu0 0.0
    %438 = vmatpush1.msra.mxu0 0.0
    %439 = vmatprep.subr.mxu0 0.0
    %440 = vmatpush1.msra.mxu0 0.0
    %441 = vmatprep.subr.mxu0 0.0
    %442 = vmatpush1.msra.mxu0 0.0
    %443 = vmatprep.subr.mxu0 0.0
    %444 = vmatpush1.msra.mxu0 0.0
    %445 = vmatprep.subr.mxu0 0.0
    %446 = vmatpush1.msra.mxu0 0.0
    %447 = vmatprep.mubr.f32.mxu0 0.0
    %448 = vmatmul.mubr.f32.gmra.mrb[0].mxu0 %v381
    %v449 = vpop.f32.mrb[0].mxu0
    %v450 = vadd.f32 %v378, %v449
    %v451 = vpop.f32.mrb[0].mxu0
    %452 = vdwg.mxu0
    %v453 = vadd.f32 %v450, %v368
    %v454 = vxor.u32 %v453, 2147483648
    %v455 = vmul.f32 %v454, 1.442695
    %v456 = vpow.pop %v455
    %v457 = vadd.f32 %v456, 1.0
    %v458 = vrcp.pop %v457
    %v459 = vmul.f32 1.0, %v458
    %v460 = vmul.f32 %v453, %v459
    %v461 = vsel %vm338, %v460, 0.0
    %462 = vadd.xlane.f32.xlu0 %v461
    %v463 = vpop.xlane.xlu0 %462
    %v464 = vmul.f32 %v463, %v342
    %v465 = vsub.f32 %v460, %v464
    %v466 = vmul.f32 %v465, %v465
    %v467 = vsel %vm338, %v466, 0.0
    %468 = vadd.xlane.f32.xlu0 %v467
    %v469 = vpop.xlane.xlu0 %468
    %v470 = vmul.f32 %v469, %v342
    %v471 = vadd.f32 %v470, 0.1
    %v472 = vrsqrt.pop %v471
    %v473 = vmul.f32 %v465, %v472
    %v474 = vld [vmem:[#allocation13] sm:$0x1]
    %v476 = vlaneseq
    %v477 = vshrl.u32 %v476, 7
    %v478 = vsub.s32 0, %v477
    %v479 = vrot.slane %v474, %v478
    %v481 = vmul.f32 %v473, %v479
    %v482 = vld [vmem:[#allocation15] sm:$0x1]
    %v484 = vlaneseq
    %v485 = vshrl.u32 %v484, 7
    %v486 = vsub.s32 0, %v485
    %v487 = vrot.slane %v482, %v486
    %v489 = vadd.f32 %v481, %v487
    %v490 = vadd.f32 %v368, %v489
    %v491 = vld [vmem:[%s10] sm:$0xff]
    %v492 = vld [vmem:[%s10 + $0x8] sm:$0xff]
    %v493 = vld [vmem:[%s10 + $0x10] sm:$0xff]
    %v494 = vld [vmem:[%s10 + $0x18] sm:$0xff]
    %v495 = vld [vmem:[#allocation16] sm:$0x1]
    %v497 = vlaneseq
    %v498 = vshrl.u32 %v497, 7
    %v499 = vsub.s32 0, %v498
    %v500 = vrot.slane %v495, %v499
    %v503 = vsel %vm338, %v489, 0
    %505 = vmatprep.subr.mxu0 0.0
    %506 = vmatpush1.msra.mxu0 %v491
    %507 = vmatprep.subr.mxu0 0.0
    %508 = vmatpush1.msra.mxu0 %v492
    %509 = vmatprep.subr.mxu0 0.0
    %510 = vmatpush1.msra.mxu0 %v493
    %511 = vmatprep.subr.mxu0 0.0
    %512 = vmatpush1.msra.mxu0 %v494
    %513 = vmatprep.subr.mxu0 0.0
    %514 = vmatpush1.msra.mxu0 0.0
    %515 = vmatprep.subr.mxu0 0.0
    %516 = vmatpush1.msra.mxu0 0.0
    %517 = vmatprep.subr.mxu0 0.0
    %518 = vmatpush1.msra.mxu0 0.0
    %519 = vmatprep.subr.mxu0 0.0
    %520 = vmatpush1.msra.mxu0 0.0
    %521 = vmatprep.subr.mxu0 0.0
    %522 = vmatpush1.msra.mxu0 0.0
    %523 = vmatprep.subr.mxu0 0.0
    %524 = vmatpush1.msra.mxu0 0.0
    %525 = vmatprep.subr.mxu0 0.0
    %526 = vmatpush1.msra.mxu0 0.0
    %527 = vmatprep.subr.mxu0 0.0
    %528 = vmatpush1.msra.mxu0 0.0
    %529 = vmatprep.subr.mxu0 0.0
    %530 = vmatpush1.msra.mxu0 0.0
    %531 = vmatprep.subr.mxu0 0.0
    %532 = vmatpush1.msra.mxu0 0.0
    %533 = vmatprep.subr.mxu0 0.0
    %534 = vmatpush1.msra.mxu0 0.0
    %535 = vmatprep.subr.mxu0 0.0
    %536 = vmatpush1.msra.mxu0 0.0
    %537 = vmatprep.subr.mxu0 0.0
    %538 = vmatpush1.msra.mxu0 0.0
    %539 = vmatprep.subr.mxu0 0.0
    %540 = vmatpush1.msra.mxu0 0.0
    %541 = vmatprep.subr.mxu0 0.0
    %542 = vmatpush1.msra.mxu0 0.0
    %543 = vmatprep.subr.mxu0 0.0
    %544 = vmatpush1.msra.mxu0 0.0
    %545 = vmatprep.subr.mxu0 0.0
    %546 = vmatpush1.msra.mxu0 0.0
    %547 = vmatprep.subr.mxu0 0.0
    %548 = vmatpush1.msra.mxu0 0.0
    %549 = vmatprep.subr.mxu0 0.0
    %550 = vmatpush1.msra.mxu0 0.0
    %551 = vmatprep.subr.mxu0 0.0
    %552 = vmatpush1.msra.mxu0 0.0
    %553 = vmatprep.subr.mxu0 0.0
    %554 = vmatpush1.msra.mxu0 0.0
    %555 = vmatprep.subr.mxu0 0.0
    %556 = vmatpush1.msra.mxu0 0.0
    %557 = vmatprep.subr.mxu0 0.0
    %558 = vmatpush1.msra.mxu0 0.0
    %559 = vmatprep.subr.mxu0 0.0
    %560 = vmatpush1.msra.mxu0 0.0
    %561 = vmatprep.subr.mxu0 0.0
    %562 = vmatpush1.msra.mxu0 0.0
    %563 = vmatprep.subr.mxu0 0.0
    %564 = vmatpush1.msra.mxu0 0.0
    %565 = vmatprep.subr.mxu0 0.0
    %566 = vmatpush1.msra.mxu0 0.0
    %567 = vmatprep.subr.mxu0 0.0
    %568 = vmatpush1.msra.mxu0 0.0
    %569 = vmatprep.mubr.f32.mxu0 0.0
    %570 = vmatmul.mubr.f32.gmra.mrb[0].mxu0 %v503
    %v571 = vpop.f32.mrb[0].mxu0
    %v572 = vadd.f32 %v500, %v571
    %v573 = vpop.f32.mrb[0].mxu0
    %574 = vdwg.mxu0
    %v575 = vadd.f32 %v572, %v490
    %v576 = vxor.u32 %v575, 2147483648
    %v577 = vmul.f32 %v576, 1.442695
    %v578 = vpow.pop %v577
    %v579 = vadd.f32 %v578, 1.0
    %v580 = vrcp.pop %v579
    %v581 = vmul.f32 1.0, %v580
    %v582 = vmul.f32 %v575, %v581
    %v583 = vsel %vm338, %v582, 0.0
    %584 = vadd.xlane.f32.xlu0 %v583
    %v585 = vpop.xlane.xlu0 %584
    %v586 = vmul.f32 %v585, %v342
    %v587 = vsub.f32 %v582, %v586
    %v588 = vmul.f32 %v587, %v587
    %v589 = vsel %vm338, %v588, 0.0
    %590 = vadd.xlane.f32.xlu0 %v589
    %v591 = vpop.xlane.xlu0 %590
    %v592 = vmul.f32 %v591, %v342
    %v593 = vadd.f32 %v592, 0.1
    %v594 = vrsqrt.pop %v593
    %v595 = vmul.f32 %v587, %v594
    %v596 = vld [vmem:[#allocation18] sm:$0x1]
    %v598 = vlaneseq
    %v599 = vshrl.u32 %v598, 7
    %v600 = vsub.s32 0, %v599
    %v601 = vrot.slane %v596, %v600
    %v603 = vmul.f32 %v595, %v601
    %v604 = vld [vmem:[#allocation19] sm:$0x1]
    %v606 = vlaneseq
    %v607 = vshrl.u32 %v606, 7
    %v608 = vsub.s32 0, %v607
    %v609 = vrot.slane %v604, %v608
    %v611 = vadd.f32 %v603, %v609
    %v612 = vadd.f32 %v490, %v611
    %v613 = vld [vmem:[%s14] sm:$0xff]
    %v614 = vld [vmem:[%s14 + $0x8] sm:$0xff]
    %v615 = vld [vmem:[%s14 + $0x10] sm:$0xff]
    %v616 = vld [vmem:[%s14 + $0x18] sm:$0xff]
    %v617 = vld [vmem:[#allocation21] sm:$0x1]
    %v619 = vlaneseq
    %v620 = vshrl.u32 %v619, 7
    %v621 = vsub.s32 0, %v620
    %v622 = vrot.slane %v617, %v621
    %v625 = vsel %vm338, %v611, 0
    %627 = vmatprep.subr.mxu0 0.0
    %628 = vmatpush1.msra.mxu0 %v613
    %629 = vmatprep.subr.mxu0 0.0
    %630 = vmatpush1.msra.mxu0 %v614
    %631 = vmatprep.subr.mxu0 0.0
    %632 = vmatpush1.msra.mxu0 %v615
    %633 = vmatprep.subr.mxu0 0.0
    %634 = vmatpush1.msra.mxu0 %v616
    %635 = vmatprep.subr.mxu0 0.0
    %636 = vmatpush1.msra.mxu0 0.0
    %637 = vmatprep.subr.mxu0 0.0
    %638 = vmatpush1.msra.mxu0 0.0
    %639 = vmatprep.subr.mxu0 0.0
    %640 = vmatpush1.msra.mxu0 0.0
    %641 = vmatprep.subr.mxu0 0.0
    %642 = vmatpush1.msra.mxu0 0.0
    %643 = vmatprep.subr.mxu0 0.0
    %644 = vmatpush1.msra.mxu0 0.0
    %645 = vmatprep.subr.mxu0 0.0
    %646 = vmatpush1.msra.mxu0 0.0
    %647 = vmatprep.subr.mxu0 0.0
    %648 = vmatpush1.msra.mxu0 0.0
    %649 = vmatprep.subr.mxu0 0.0
    %650 = vmatpush1.msra.mxu0 0.0
    %651 = vmatprep.subr.mxu0 0.0
    %652 = vmatpush1.msra.mxu0 0.0
    %653 = vmatprep.subr.mxu0 0.0
    %654 = vmatpush1.msra.mxu0 0.0
    %655 = vmatprep.subr.mxu0 0.0
    %656 = vmatpush1.msra.mxu0 0.0
    %657 = vmatprep.subr.mxu0 0.0
    %658 = vmatpush1.msra.mxu0 0.0
    %659 = vmatprep.subr.mxu0 0.0
    %660 = vmatpush1.msra.mxu0 0.0
    %661 = vmatprep.subr.mxu0 0.0
    %662 = vmatpush1.msra.mxu0 0.0
    %663 = vmatprep.subr.mxu0 0.0
    %664 = vmatpush1.msra.mxu0 0.0
    %665 = vmatprep.subr.mxu0 0.0
    %666 = vmatpush1.msra.mxu0 0.0
    %667 = vmatprep.subr.mxu0 0.0
    %668 = vmatpush1.msra.mxu0 0.0
    %669 = vmatprep.subr.mxu0 0.0
    %670 = vmatpush1.msra.mxu0 0.0
    %671 = vmatprep.subr.mxu0 0.0
    %672 = vmatpush1.msra.mxu0 0.0
    %673 = vmatprep.subr.mxu0 0.0
    %674 = vmatpush1.msra.mxu0 0.0
    %675 = vmatprep.subr.mxu0 0.0
    %676 = vmatpush1.msra.mxu0 0.0
    %677 = vmatprep.subr.mxu0 0.0
    %678 = vmatpush1.msra.mxu0 0.0
    %679 = vmatprep.subr.mxu0 0.0
    %680 = vmatpush1.msra.mxu0 0.0
    %681 = vmatprep.subr.mxu0 0.0
    %682 = vmatpush1.msra.mxu0 0.0
    %683 = vmatprep.subr.mxu0 0.0
    %684 = vmatpush1.msra.mxu0 0.0
    %685 = vmatprep.subr.mxu0 0.0
    %686 = vmatpush1.msra.mxu0 0.0
    %687 = vmatprep.subr.mxu0 0.0
    %688 = vmatpush1.msra.mxu0 0.0
    %689 = vmatprep.subr.mxu0 0.0
    %690 = vmatpush1.msra.mxu0 0.0
    %691 = vmatprep.mubr.f32.mxu0 0.0
    %692 = vmatmul.mubr.f32.gmra.mrb[0].mxu0 %v625
    %v693 = vpop.f32.mrb[0].mxu0
    %v694 = vadd.f32 %v622, %v693
    %v695 = vpop.f32.mrb[0].mxu0
    %696 = vdwg.mxu0
    %v697 = vadd.f32 %v694, %v612
    %v698 = vxor.u32 %v697, 2147483648
    %v699 = vmul.f32 %v698, 1.442695
    %v700 = vpow.pop %v699
    %v701 = vadd.f32 %v700, 1.0
    %v702 = vrcp.pop %v701
    %v703 = vmul.f32 1.0, %v702
    %v704 = vmul.f32 %v697, %v703
    %v705 = vsel %vm338, %v704, 0.0
    %706 = vadd.xlane.f32.xlu0 %v705
    %v707 = vpop.xlane.xlu0 %706
    %v708 = vmul.f32 %v707, %v342
    %v709 = vsub.f32 %v704, %v708
    %v710 = vmul.f32 %v709, %v709
    %v711 = vsel %vm338, %v710, 0.0
    %712 = vadd.xlane.f32.xlu0 %v711
    %v713 = vpop.xlane.xlu0 %712
    %v714 = vmul.f32 %v713, %v342
    %v715 = vadd.f32 %v714, 0.1
    %v716 = vrsqrt.pop %v715
    %v717 = vmul.f32 %v709, %v716
    %v718 = vld [vmem:[#allocation22] sm:$0x1]
    %v720 = vlaneseq
    %v721 = vshrl.u32 %v720, 7
    %v722 = vsub.s32 0, %v721
    %v723 = vrot.slane %v718, %v722
    %v725 = vmul.f32 %v717, %v723
    %v726 = vld [vmem:[#allocation24] sm:$0x1]
    %v728 = vlaneseq
    %v729 = vshrl.u32 %v728, 7
    %v730 = vsub.s32 0, %v729
    %v731 = vrot.slane %v726, %v730
    %v733 = vadd.f32 %v725, %v731
    %v734 = vadd.f32 %v612, %v733
    %v735 = vld [vmem:[%s18] sm:$0xff]
    %v736 = vld [vmem:[%s18 + $0x8] sm:$0xff]
    %v737 = vld [vmem:[%s18 + $0x10] sm:$0xff]
    %v738 = vld [vmem:[%s18 + $0x18] sm:$0xff]
    %v739 = vld [vmem:[%s19] sm:$0x1]
    %v741 = vlaneseq
    %v742 = vshrl.u32 %v741, 7
    %v743 = vsub.s32 0, %v742
    %v744 = vrot.slane %v739, %v743
    %v747 = vsel %vm338, %v733, 0
    %749 = vmatprep.subr.mxu0 0.0
    %750 = vmatpush1.msra.mxu0 %v735
    %751 = vmatprep.subr.mxu0 0.0
    %752 = vmatpush1.msra.mxu0 %v736
    %753 = vmatprep.subr.mxu0 0.0
    %754 = vmatpush1.msra.mxu0 %v737
    %755 = vmatprep.subr.mxu0 0.0
    %756 = vmatpush1.msra.mxu0 %v738
    %757 = vmatprep.subr.mxu0 0.0
    %758 = vmatpush1.msra.mxu0 0.0
    %759 = vmatprep.subr.mxu0 0.0
    %760 = vmatpush1.msra.mxu0 0.0
    %761 = vmatprep.subr.mxu0 0.0
    %762 = vmatpush1.msra.mxu0 0.0
    %763 = vmatprep.subr.mxu0 0.0
    %764 = vmatpush1.msra.mxu0 0.0
    %765 = vmatprep.subr.mxu0 0.0
    %766 = vmatpush1.msra.mxu0 0.0
    %767 = vmatprep.subr.mxu0 0.0
    %768 = vmatpush1.msra.mxu0 0.0
    %769 = vmatprep.subr.mxu0 0.0
    %770 = vmatpush1.msra.mxu0 0.0
    %771 = vmatprep.subr.mxu0 0.0
    %772 = vmatpush1.msra.mxu0 0.0
    %773 = vmatprep.subr.mxu0 0.0
    %774 = vmatpush1.msra.mxu0 0.0
    %775 = vmatprep.subr.mxu0 0.0
    %776 = vmatpush1.msra.mxu0 0.0
    %777 = vmatprep.subr.mxu0 0.0
    %778 = vmatpush1.msra.mxu0 0.0
    %779 = vmatprep.subr.mxu0 0.0
    %780 = vmatpush1.msra.mxu0 0.0
    %781 = vmatprep.subr.mxu0 0.0
    %782 = vmatpush1.msra.mxu0 0.0
    %783 = vmatprep.subr.mxu0 0.0
    %784 = vmatpush1.msra.mxu0 0.0
    %785 = vmatprep.subr.mxu0 0.0
    %786 = vmatpush1.msra.mxu0 0.0
    %787 = vmatprep.subr.mxu0 0.0
    %788 = vmatpush1.msra.mxu0 0.0
    %789 = vmatprep.subr.mxu0 0.0
    %790 = vmatpush1.msra.mxu0 0.0
    %791 = vmatprep.subr.mxu0 0.0
    %792 = vmatpush1.msra.mxu0 0.0
    %793 = vmatprep.subr.mxu0 0.0
    %794 = vmatpush1.msra.mxu0 0.0
    %795 = vmatprep.subr.mxu0 0.0
    %796 = vmatpush1.msra.mxu0 0.0
    %797 = vmatprep.subr.mxu0 0.0
    %798 = vmatpush1.msra.mxu0 0.0
    %799 = vmatprep.subr.mxu0 0.0
    %800 = vmatpush1.msra.mxu0 0.0
    %801 = vmatprep.subr.mxu0 0.0
    %802 = vmatpush1.msra.mxu0 0.0
    %803 = vmatprep.subr.mxu0 0.0
    %804 = vmatpush1.msra.mxu0 0.0
    %805 = vmatprep.subr.mxu0 0.0
    %806 = vmatpush1.msra.mxu0 0.0
    %807 = vmatprep.subr.mxu0 0.0
    %808 = vmatpush1.msra.mxu0 0.0
    %809 = vmatprep.subr.mxu0 0.0
    %810 = vmatpush1.msra.mxu0 0.0
    %811 = vmatprep.subr.mxu0 0.0
    %812 = vmatpush1.msra.mxu0 0.0
    %813 = vmatprep.mubr.f32.mxu0 0.0
    %814 = vmatmul.mubr.f32.gmra.mrb[0].mxu0 %v747
    %v815 = vpop.f32.mrb[0].mxu0
    %v816 = vadd.f32 %v744, %v815
    %v817 = vpop.f32.mrb[0].mxu0
    %818 = vdwg.mxu0
    %v819 = vadd.f32 %v816, %v734
    %v820 = vxor.u32 %v819, 2147483648
    %v821 = vmul.f32 %v820, 1.442695
    %v822 = vpow.pop %v821
    %v823 = vadd.f32 %v822, 1.0
    %v824 = vrcp.pop %v823
    %v825 = vmul.f32 1.0, %v824
    %v826 = vmul.f32 %v819, %v825
    %v827 = vsel %vm338, %v826, 0.0
    %828 = vadd.xlane.f32.xlu0 %v827
    %v829 = vpop.xlane.xlu0 %828
    %v830 = vmul.f32 %v829, %v342
    %v831 = vsub.f32 %v826, %v830
    %v832 = vmul.f32 %v831, %v831
    %v833 = vsel %vm338, %v832, 0.0
    %834 = vadd.xlane.f32.xlu0 %v833
    %v835 = vpop.xlane.xlu0 %834
    %v836 = vmul.f32 %v835, %v342
    %v837 = vadd.f32 %v836, 0.1
    %v838 = vrsqrt.pop %v837
    %v839 = vmul.f32 %v831, %v838
    %v840 = vld [vmem:[%s20] sm:$0x1]
    %v842 = vlaneseq
    %v843 = vshrl.u32 %v842, 7
    %v844 = vsub.s32 0, %v843
    %v845 = vrot.slane %v840, %v844
    %v847 = vmul.f32 %v839, %v845
    %v848 = vld [vmem:[%s21] sm:$0x1]
    %v850 = vlaneseq
    %v851 = vshrl.u32 %v850, 7
    %v852 = vsub.s32 0, %v851
    %v853 = vrot.slane %v848, %v852
    %v855 = vadd.f32 %v847, %v853
    %v856 = vld [vmem:[%s22] sm:$0xff]
    %v857 = vld [vmem:[%s22 + $0x8] sm:$0xff]
    %v858 = vld [vmem:[%s22 + $0x10] sm:$0xff]
    %v859 = vld [vmem:[%s22 + $0x18] sm:$0xff]
    %v860 = vld [vmem:[%s23] sm:$0x1]
    %v862 = vlaneseq
    %v863 = vshrl.u32 %v862, 7
    %v864 = vsub.s32 0, %v863
    %v865 = vrot.slane %v860, %v864
    %v868 = vsel %vm338, %v855, 0
    %870 = vmatprep.subr.mxu0 0.0
    %871 = vmatpush1.msra.mxu0 %v856
    %872 = vmatprep.subr.mxu0 0.0
    %873 = vmatpush1.msra.mxu0 %v857
    %874 = vmatprep.subr.mxu0 0.0
    %875 = vmatpush1.msra.mxu0 %v858
    %876 = vmatprep.subr.mxu0 0.0
    %877 = vmatpush1.msra.mxu0 %v859
    %878 = vmatprep.subr.mxu0 0.0
    %879 = vmatpush1.msra.mxu0 0.0
    %880 = vmatprep.subr.mxu0 0.0
    %881 = vmatpush1.msra.mxu0 0.0
    %882 = vmatprep.subr.mxu0 0.0
    %883 = vmatpush1.msra.mxu0 0.0
    %884 = vmatprep.subr.mxu0 0.0
    %885 = vmatpush1.msra.mxu0 0.0
    %886 = vmatprep.subr.mxu0 0.0
    %887 = vmatpush1.msra.mxu0 0.0
    %888 = vmatprep.subr.mxu0 0.0
    %889 = vmatpush1.msra.mxu0 0.0
    %890 = vmatprep.subr.mxu0 0.0
    %891 = vmatpush1.msra.mxu0 0.0
    %892 = vmatprep.subr.mxu0 0.0
    %893 = vmatpush1.msra.mxu0 0.0
    %894 = vmatprep.subr.mxu0 0.0
    %895 = vmatpush1.msra.mxu0 0.0
    %896 = vmatprep.subr.mxu0 0.0
    %897 = vmatpush1.msra.mxu0 0.0
    %898 = vmatprep.subr.mxu0 0.0
    %899 = vmatpush1.msra.mxu0 0.0
    %900 = vmatprep.subr.mxu0 0.0
    %901 = vmatpush1.msra.mxu0 0.0
    %902 = vmatprep.subr.mxu0 0.0
    %903 = vmatpush1.msra.mxu0 0.0
    %904 = vmatprep.subr.mxu0 0.0
    %905 = vmatpush1.msra.mxu0 0.0
    %906 = vmatprep.subr.mxu0 0.0
    %907 = vmatpush1.msra.mxu0 0.0
    %908 = vmatprep.subr.mxu0 0.0
    %909 = vmatpush1.msra.mxu0 0.0
    %910 = vmatprep.subr.mxu0 0.0
    %911 = vmatpush1.msra.mxu0 0.0
    %912 = vmatprep.subr.mxu0 0.0
    %913 = vmatpush1.msra.mxu0 0.0
    %914 = vmatprep.subr.mxu0 0.0
    %915 = vmatpush1.msra.mxu0 0.0
    %916 = vmatprep.subr.mxu0 0.0
    %917 = vmatpush1.msra.mxu0 0.0
    %918 = vmatprep.subr.mxu0 0.0
    %919 = vmatpush1.msra.mxu0 0.0
    %920 = vmatprep.subr.mxu0 0.0
    %921 = vmatpush1.msra.mxu0 0.0
    %922 = vmatprep.subr.mxu0 0.0
    %923 = vmatpush1.msra.mxu0 0.0
    %924 = vmatprep.subr.mxu0 0.0
    %925 = vmatpush1.msra.mxu0 0.0
    %926 = vmatprep.subr.mxu0 0.0
    %927 = vmatpush1.msra.mxu0 0.0
    %928 = vmatprep.subr.mxu0 0.0
    %929 = vmatpush1.msra.mxu0 0.0
    %930 = vmatprep.subr.mxu0 0.0
    %931 = vmatpush1.msra.mxu0 0.0
    %932 = vmatprep.subr.mxu0 0.0
    %933 = vmatpush1.msra.mxu0 0.0
    %934 = vmatprep.mubr.f32.mxu0 0.0
    %935 = vmatmul.mubr.f32.gmra.mrb[0].mxu0 %v868
    %v936 = vpop.f32.mrb[0].mxu0
    %v937 = vadd.f32 %v865, %v936
    %v938 = vpop.f32.mrb[0].mxu0
    %939 = vdwg.mxu0
    %940 = vst.msk [vmem:[#allocation25] sm:$0xff] %vm338, %v937
    // Predicated region
    $region146: #{tpu_custom_call.1} parent=1 // pred_check
      _
    $region147: #{tpu_custom_call.1} parent=1 // pred_check_branch
      %942 = sbr.rel (0) target = $region149
    $region148: #{tpu_custom_call.1} parent=1 // pred_region
      %s944 = ssub.s32 128, 128
      %945 = vsyncadd [#allocation6], %s944
      %s947 = sshll.u32 [#allocation25], 4
      %s948 = int_to_ptr.vmem [resolvable:$true] %s947
      %950 = dma.vmem_to_hbm [thread:$0]  %s948, 128, %s24, [#allocation6]
    $region149: #{tpu_custom_call.1} parent=1 // pred_fallthru
      _
    // Predicated region
    $region150: #{tpu_custom_call.1} parent=1 // pred_check
      _
    $region151: #{tpu_custom_call.1} parent=1 // pred_check_branch
      %952 = sbr.rel (0) target = $region153
    $region152: #{tpu_custom_call.1} parent=1 // pred_region
      %953 = dma.done [#allocation6], 128
    $region153: #{tpu_custom_call.1} parent=1 // pred_fallthru
      _
    %954 = vsyncpa [#allocation5], 1
    %955 = vsyncpa [#allocation8], 1
    %956 = vsyncpa [#allocation11], 1
    %957 = vsyncpa [#allocation14], 1
    %958 = vsyncpa [#allocation17], 1
    %959 = vsyncpa [#allocation20], 1
    %960 = vsyncpa [#allocation23], 1
    %961 = vsyncpa [#allocation6], 1

</llo_original>
